<compile_context>
chip_gen: v6e
topology: v6e:2x2x1
jax: 0.10.0
libtpu: 0.0.40
codegen_flags: <defaults>
</compile_context>

<pallas_src>
import math
import functools

import jax
import jax.numpy as jnp
from jax import lax
from jax.experimental import pallas as pl
from jax.experimental.pallas import tpu as pltpu


# ------------------------------------------------------------------ helpers

def _layernorm(h, w, b, eps=1e-5):
    mu = jnp.mean(h, axis=-1, keepdims=True)
    var = jnp.mean(jnp.square(h - mu), axis=-1, keepdims=True)
    return (h - mu) * lax.rsqrt(var + eps) * w + b


def _const_spec(shape):
    """Full-array BlockSpec with a constant index map; single-buffered (no pipelining
    needed for blocks that never change)."""
    nd = len(shape)
    idx = lambda *args, _nd=nd: (0,) * _nd
    try:
        return pl.BlockSpec(shape, idx, pipeline_mode=pl.Buffered(1))
    except Exception:  # older/newer API without pipeline_mode -> default buffering
        return pl.BlockSpec(shape, idx)


def _pick_tile(n, candidates):
    for c in candidates:
        if c <= n and n % c == 0:
            return c
    return n


@functools.lru_cache(maxsize=1)
def _vmem_limit_bytes():
    """Generation-aware VMEM limit: 64 MiB on 128 MiB chips (v5e/v6e), ~80% of
    physical VMEM where it is smaller (v7x: 64 MiB per TC)."""
    cap = None
    try:
        cap = getattr(pltpu.get_tpu_info(), "vmem_capacity_bytes", None)
    except Exception:
        cap = None
    if cap is None or cap >= 128 * 1024 * 1024:
        return 64 * 1024 * 1024
    return int(cap * 0.8)


# ------------------------------------------------------------------ kernels

def gpt_layer_kernel(x_q_ref, x_full_ref,
                     ln1w_ref, ln1b_ref, wqkv_ref, bqkv_ref, wproj_ref, bproj_ref,
                     ln2w_ref, ln2b_ref, wfc_ref, bfc_ref, wp2_ref, bp2_ref,
                     o_ref, qkv_sc, y_sc, *, n_head):
    """Fused transformer layer for one (batch, q-tile) block:
       x + attn(ln_1(x)) followed by (+ mlp(ln_2(.)))."""
    qt = pl.program_id(1)
    Tq = x_q_ref.shape[1]
    T = x_full_ref.shape[1]
    C = x_q_ref.shape[2]
    hd = C // n_head

    # --- once per batch element: full-sequence ln_1 + fused QKV, bf16, Q pre-scaled ---
    @pl.when(qt == 0)
    def _():
        xf = x_full_ref[0]                                        # (T, C) f32
        h = _layernorm(xf, ln1w_ref[...], ln1b_ref[...])
        qkv = jnp.dot(h.astype(jnp.bfloat16), wqkv_ref[...],
                      preferred_element_type=jnp.float32) + bqkv_ref[...]   # (T, 3C)
        scale = 1.0 / math.sqrt(hd)
        qkv_sc[:, :C] = (qkv[:, :C] * scale).astype(jnp.bfloat16)  # scaled Q
        qkv_sc[:, C:] = qkv[:, C:].astype(jnp.bfloat16)            # K, V

    x = x_q_ref[0]                                                 # (Tq, C) f32 residual rows

    q0 = pl.multiple_of(qt * Tq, Tq)
    row = lax.broadcasted_iota(jnp.int32, (Tq, T), 0) + q0
    col = lax.broadcasted_iota(jnp.int32, (Tq, T), 1)
    causal = row >= col

    # --- per-head attention; outputs accumulated in-place into y_sc (Tq, C) ---
    for i in range(n_head):                                        # static head loop
        qh = qkv_sc[pl.ds(q0, Tq), pl.ds(i * hd, hd)]              # (Tq, hd) bf16 (pre-scaled)
        kh = qkv_sc[:, pl.ds(C + i * hd, hd)]                      # (T,  hd) bf16
        vh = qkv_sc[:, pl.ds(2 * C + i * hd, hd)]                  # (T,  hd) bf16
        s = lax.dot_general(qh, kh, (((1,), (1,)), ((), ())),
                            preferred_element_type=jnp.float32)    # (Tq, T)
        s = jnp.where(causal, s, -jnp.inf)
        s = s - jnp.max(s, axis=-1, keepdims=True)
        p = jnp.exp(s)
        p = p * pl.reciprocal(jnp.sum(p, axis=-1, keepdims=True), approx=True)
        y_sc[:, i * hd:(i + 1) * hd] = jnp.dot(
            p.astype(jnp.bfloat16), vh, preferred_element_type=jnp.float32)

    # fused output projection + attention residual
    y = jnp.dot(y_sc[...].astype(jnp.bfloat16), wproj_ref[...],
                preferred_element_type=jnp.float32) + bproj_ref[...]
    x1 = x + y                                                     # (Tq, C) f32

    # --- ln_2 + MLP (exact GELU) + residual, same rows ---
    h2 = _layernorm(x1, ln2w_ref[...], ln2b_ref[...])
    g = jnp.dot(h2.astype(jnp.bfloat16), wfc_ref[...],
                preferred_element_type=jnp.float32) + bfc_ref[...]          # (Tq, 4C)
    g = 0.5 * g * (1.0 + lax.erf(g * (1.0 / math.sqrt(2.0))))
    m = jnp.dot(g.astype(jnp.bfloat16), wp2_ref[...],
                preferred_element_type=jnp.float32) + bp2_ref[...]          # (Tq, C)
    o_ref[0] = x1 + m


def gpt_head_kernel(xl_ref, lnfw_ref, lnfb_ref, wtile_ref, o_ref, xn_sc):
    """ln_f (computed once, hoisted to j==0) + tied lm_head over a vocab tile for ALL
    B last-token rows at once: (B,C) @ (C,v_tile)."""
    @pl.when(pl.program_id(0) == 0)
    def _():
        xn_sc[...] = _layernorm(xl_ref[...], lnfw_ref[...],
                                lnfb_ref[...]).astype(jnp.bfloat16)
    o_ref[...] = jnp.dot(xn_sc[...], wtile_ref[...],
                         preferred_element_type=jnp.float32)


# ------------------------------------------------------------------ wrappers

def run_layer(x, p, n_head, t_q):
    B, T, C = x.shape
    weights = (p["ln1_w"], p["ln1_b"], p["w_qkv"], p["b_qkv"], p["w_proj"], p["b_proj"],
               p["ln2_w"], p["ln2_b"], p["w_fc"], p["b_fc"], p["w_p2"], p["b_p2"])
    kern = functools.partial(gpt_layer_kernel, n_head=n_head)
    return pl.pallas_call(
        kern,
        out_shape=jax.ShapeDtypeStruct((B, T, C), jnp.float32),
        grid=(B, T // t_q),
        in_specs=[pl.BlockSpec((1, t_q, C), lambda b, q: (b, q, 0)),   # q-tiled residual rows
                  pl.BlockSpec((1, T, C), lambda b, q: (b, 0, 0))]     # full seq (for K/V @ qt==0)
                 + [_const_spec(w.shape) for w in weights],
        out_specs=pl.BlockSpec((1, t_q, C), lambda b, q: (b, q, 0)),
        scratch_shapes=[pltpu.VMEM((T, 3 * C), jnp.bfloat16),          # full QKV (bf16, Q pre-scaled)
                        pltpu.VMEM((t_q, C), jnp.float32)],            # per-tile head accumulator
        compiler_params=pltpu.CompilerParams(
            dimension_semantics=("parallel", "arbitrary"),
            vmem_limit_bytes=_vmem_limit_bytes()),
    )(x, x, *weights)


def run_head(x_last, ln_f_w, ln_f_b, wte_t_pad, v_tile):
    B, C = x_last.shape
    Vp = wte_t_pad.shape[1]
    return pl.pallas_call(
        gpt_head_kernel,
        out_shape=jax.ShapeDtypeStruct((B, Vp), jnp.float32),
        grid=(Vp // v_tile,),
        in_specs=[_const_spec((B, C)),
                  _const_spec(ln_f_w.shape),
                  _const_spec(ln_f_b.shape),
                  pl.BlockSpec((C, v_tile), lambda j: (0, j))],
        out_specs=pl.BlockSpec((B, v_tile), lambda j: (0, j)),
        scratch_shapes=[pltpu.VMEM((B, C), jnp.bfloat16)],             # ln_f'd last-token rows
        compiler_params=pltpu.CompilerParams(
            dimension_semantics=("arbitrary",),
            vmem_limit_bytes=_vmem_limit_bytes()),
    )(x_last, ln_f_w, ln_f_b, wte_t_pad)


def gpt_forward(idx, params, cfg):
    """Matches GPT.forward(idx, targets=None): returns (logits (B,1,V), None)."""
    B, T = idx.shape
    assert T <= cfg["block_size"]
    tok_emb = jnp.take(params["wte"], idx, axis=0)          # (B, T, C) embedding gather
    pos_emb = params["wpe"][:T][None, :, :]                 # (1, T, C)
    x = tok_emb + pos_emb                                   # dropout p=0 -> no-op

    big_vmem = _vmem_limit_bytes() >= 64 * 1024 * 1024      # 128 MiB chips get bigger tiles
    tq_cands = (512, 256, 128, 64, 32, 16, 8) if big_vmem else (256, 128, 64, 32, 16, 8)
    t_q = _pick_tile(T, tq_cands)
    for p in params["blocks"]:
        x = run_layer(x, p, cfg["n_head"], t_q)

    V = params["wte"].shape[0]
    x_last = x[:, T - 1, :]                                 # (B, C) last-token rows
    logits = run_head(x_last, params["ln_f_w"], params["ln_f_b"],
                      params["wte_t_pad"], params["v_tile"])
    logits = logits[:, :V][:, None, :]                      # strip vocab padding -> (B, 1, V)
    return logits, None


# ------------------------------------------------------------------ params

def init_params(key, cfg):
    V, BS, L = cfg["vocab_size"], cfg["block_size"], cfg["n_layer"]
    C = cfg["n_embd"]
    std = 0.02
    proj_std = 0.02 / math.sqrt(2 * L)

    keys = iter(jax.random.split(key, 2 + 4 * L))
    wte = jax.random.normal(next(keys), (V, C), jnp.float32) * std
    wpe = jax.random.normal(next(keys), (BS, C), jnp.float32) * std

    blocks = []
    for _ in range(L):
        attn_w = jax.random.normal(next(keys), (3 * C, C), jnp.float32) * std   # torch (out,in)
        proj_w = jax.random.normal(next(keys), (C, C), jnp.float32) * proj_std
        fc_w   = jax.random.normal(next(keys), (4 * C, C), jnp.float32) * std
        p2_w   = jax.random.normal(next(keys), (C, 4 * C), jnp.float32) * proj_std
        blocks.append(dict(
            ln1_w=jnp.ones((1, C), jnp.float32), ln1_b=jnp.zeros((1, C), jnp.float32),
            w_qkv=attn_w.T.astype(jnp.bfloat16),            # (C, 3C) bf16
            b_qkv=jnp.zeros((1, 3 * C), jnp.float32),
            w_proj=proj_w.T.astype(jnp.bfloat16),           # (C, C) bf16
            b_proj=jnp.zeros((1, C), jnp.float32),
            ln2_w=jnp.ones((1, C), jnp.float32), ln2_b=jnp.zeros((1, C), jnp.float32),
            w_fc=fc_w.T.astype(jnp.bfloat16),               # (C, 4C) bf16
            b_fc=jnp.zeros((1, 4 * C), jnp.float32),
            w_p2=p2_w.T.astype(jnp.bfloat16),               # (4C, C) bf16
            b_p2=jnp.zeros((1, C), jnp.float32),
        ))

    # Tied lm_head weight (C, V), vocab padded to a lane-dense tile multiple so the
    # head kernel never needs a whole-V block (e.g. GPT-2's 50257).
    v_tile = 1024 if V >= 1024 else ((V + 127) // 128) * 128
    Vp = ((V + v_tile - 1) // v_tile) * v_tile
    wte_t = wte.T.astype(jnp.bfloat16)                      # (C, V) bf16
    wte_t_pad = jnp.pad(wte_t, ((0, 0), (0, Vp - V)))

    return dict(wte=wte, wpe=wpe, blocks=blocks,
                ln_f_w=jnp.ones((1, C), jnp.float32),
                ln_f_b=jnp.zeros((1, C), jnp.float32),
                wte_t=wte_t, wte_t_pad=wte_t_pad, v_tile=v_tile)


# ------------------------------------------------------------------ pure-JAX reference
# Uses the same bf16-rounded weights (cast back to f32) so the comparison isolates the
# kernels' computation; remaining diffs come only from in-kernel bf16 activation casts
# and the approximate softmax reciprocal.

def _ref_block(x, p, n_head):
    B, T, C = x.shape
    hd = C // n_head
    h = _layernorm(x, p["ln1_w"][0], p["ln1_b"][0])
    qkv = h @ p["w_qkv"].astype(jnp.float32) + p["b_qkv"][0]
    q, k, v = jnp.split(qkv, 3, axis=-1)
    q = q.reshape(B, T, n_head, hd).transpose(0, 2, 1, 3)
    k = k.reshape(B, T, n_head, hd).transpose(0, 2, 1, 3)
    v = v.reshape(B, T, n_head, hd).transpose(0, 2, 1, 3)
    s = jnp.einsum("bhtd,bhsd->bhts", q, k) / math.sqrt(hd)
    causal = jnp.tril(jnp.ones((T, T), bool))
    s = jnp.where(causal, s, -jnp.inf)
    a = jax.nn.softmax(s, axis=-1)
    y = jnp.einsum("bhts,bhsd->bhtd", a, v)
    y = y.transpose(0, 2, 1, 3).reshape(B, T, C)
    y = y @ p["w_proj"].astype(jnp.float32) + p["b_proj"][0]
    x = x + y
    h = _layernorm(x, p["ln2_w"][0], p["ln2_b"][0])
    g = h @ p["w_fc"].astype(jnp.float32) + p["b_fc"][0]
    g = 0.5 * g * (1.0 + lax.erf(g / math.sqrt(2.0)))
    return x + (g @ p["w_p2"].astype(jnp.float32) + p["b_p2"][0])


def gpt_forward_ref(idx, params, cfg):
    B, T = idx.shape
    x = jnp.take(params["wte"], idx, axis=0) + params["wpe"][:T][None]
    for p in params["blocks"]:
        x = _ref_block(x, p, cfg["n_head"])
    x = _layernorm(x, params["ln_f_w"][0], params["ln_f_b"][0])
    return x[:, -1:, :] @ params["wte_t"].astype(jnp.float32)


# ------------------------------------------------------------------ main

if __name__ == "__main__":
    cfg = dict(block_size=16, vocab_size=128, n_layer=2, n_head=4, n_embd=32,
               dropout=0.0, bias=True)
    key = jax.random.PRNGKey(0)
    pkey, ikey = jax.random.split(key)
    params = init_params(pkey, cfg)

    B, T = 2, 8
    idx = jax.random.randint(ikey, (B, T), 0, cfg["vocab_size"], dtype=jnp.int32)

    logits, loss = gpt_forward(idx, params, cfg)
    logits = jax.block_until_ready(logits)
    assert logits.shape == (B, 1, cfg["vocab_size"])
    assert loss is None

    ref = jax.block_until_ready(gpt_forward_ref(idx, params, cfg))
    if not jnp.allclose(logits, ref, rtol=2e-2, atol=1e-2):
        err = jnp.max(jnp.abs(logits - ref))
        raise AssertionError(f"Pallas GPT forward mismatch vs JAX reference (max abs err {err})")

    print("KERNEL_OK")
</pallas_src>

<mosaic_0001>
module attributes {stable_mosaic.version = 11 : i64} {
  func.func @gpt_layer_kernel(%arg0: i32, %arg1: i32, %arg2: memref<1x8x32xf32, #tpu.memory_space<vmem>>, %arg3: memref<1x8x32xf32, #tpu.memory_space<vmem>>, %arg4: memref<1x32xf32, #tpu.memory_space<vmem>>, %arg5: memref<1x32xf32, #tpu.memory_space<vmem>>, %arg6: memref<32x96xbf16, #tpu.memory_space<vmem>>, %arg7: memref<1x96xf32, #tpu.memory_space<vmem>>, %arg8: memref<32x32xbf16, #tpu.memory_space<vmem>>, %arg9: memref<1x32xf32, #tpu.memory_space<vmem>>, %arg10: memref<1x32xf32, #tpu.memory_space<vmem>>, %arg11: memref<1x32xf32, #tpu.memory_space<vmem>>, %arg12: memref<32x128xbf16, #tpu.memory_space<vmem>>, %arg13: memref<1x128xf32, #tpu.memory_space<vmem>>, %arg14: memref<128x32xbf16, #tpu.memory_space<vmem>>, %arg15: memref<1x32xf32, #tpu.memory_space<vmem>>, %arg16: memref<1x8x32xf32, #tpu.memory_space<vmem>>, %arg17: memref<8x96xbf16, #tpu.memory_space<vmem>>, %arg18: memref<8x32xf32, #tpu.memory_space<vmem>>) attributes {dimension_semantics = [#tpu.dimension_semantics<parallel>, #tpu.dimension_semantics<arbitrary>], iteration_bounds = array<i64: 2, 1>, scalar_prefetch = 0 : i64, scratch_operands = 2 : i64, tpu.core_type = #tpu.core_type<tc>, window_params = [{transform_indices = @transform_0, window_bounds = array<i64: 1, 8, 32>}, {transform_indices = @transform_1, window_bounds = array<i64: 1, 8, 32>}, {pipeline_mode = #tpu.pipeline_mode<synchronous>, transform_indices = @transform_2, window_bounds = array<i64: 1, 32>}, {pipeline_mode = #tpu.pipeline_mode<synchronous>, transform_indices = @transform_3, window_bounds = array<i64: 1, 32>}, {pipeline_mode = #tpu.pipeline_mode<synchronous>, transform_indices = @transform_4, window_bounds = array<i64: 32, 96>}, {pipeline_mode = #tpu.pipeline_mode<synchronous>, transform_indices = @transform_5, window_bounds = array<i64: 1, 96>}, {pipeline_mode = #tpu.pipeline_mode<synchronous>, transform_indices = @transform_6, window_bounds = array<i64: 32, 32>}, {pipeline_mode = #tpu.pipeline_mode<synchronous>, transform_indices = @transform_7, window_bounds = array<i64: 1, 32>}, {pipeline_mode = #tpu.pipeline_mode<synchronous>, transform_indices = @transform_8, window_bounds = array<i64: 1, 32>}, {pipeline_mode = #tpu.pipeline_mode<synchronous>, transform_indices = @transform_9, window_bounds = array<i64: 1, 32>}, {pipeline_mode = #tpu.pipeline_mode<synchronous>, transform_indices = @transform_10, window_bounds = array<i64: 32, 128>}, {pipeline_mode = #tpu.pipeline_mode<synchronous>, transform_indices = @transform_11, window_bounds = array<i64: 1, 128>}, {pipeline_mode = #tpu.pipeline_mode<synchronous>, transform_indices = @transform_12, window_bounds = array<i64: 128, 32>}, {pipeline_mode = #tpu.pipeline_mode<synchronous>, transform_indices = @transform_13, window_bounds = array<i64: 1, 32>}, {transform_indices = @transform_14, window_bounds = array<i64: 1, 8, 32>}]} {
    %c0_i32 = arith.constant 0 : i32
    %0 = arith.cmpi eq, %arg1, %c0_i32 : i32
    %1 = arith.extui %0 : i1 to i32
    %c0_i32_0 = arith.constant 0 : i32
    %2 = arith.cmpi ne, %1, %c0_i32_0 : i32
    scf.if %2 {
      %c0_71 = arith.constant 0 : index
      %c0_72 = arith.constant 0 : index
      %c0_73 = arith.constant 0 : index
      %148 = vector.load %arg3[%c0_71, %c0_72, %c0_73] : memref<1x8x32xf32, #tpu.memory_space<vmem>>, vector<1x8x32xf32>
      %149 = vector.shape_cast %148 : vector<1x8x32xf32> to vector<8x32xf32>
      %c0_74 = arith.constant 0 : index
      %c0_75 = arith.constant 0 : index
      %150 = vector.load %arg4[%c0_74, %c0_75] : memref<1x32xf32, #tpu.memory_space<vmem>>, vector<1x32xf32>
      %c0_76 = arith.constant 0 : index
      %c0_77 = arith.constant 0 : index
      %151 = vector.load %arg5[%c0_76, %c0_77] : memref<1x32xf32, #tpu.memory_space<vmem>>, vector<1x32xf32>
      %cst_78 = arith.constant dense<0.000000e+00> : vector<8xf32>
      %152 = vector.multi_reduction <add>, %149, %cst_78 [1] : vector<8x32xf32> to vector<8xf32>
      %153 = vector.shape_cast %152 : vector<8xf32> to vector<8x1xf32>
      %cst_79 = arith.constant 3.200000e+01 : f32
      %154 = vector.broadcast %cst_79 : f32 to vector<8x1xf32>
      %155 = arith.divf %153, %154 : vector<8x1xf32>
      %156 = vector.broadcast %155 : vector<8x1xf32> to vector<8x32xf32>
      %157 = arith.subf %149, %156 : vector<8x32xf32>
      %158 = arith.mulf %157, %157 : vector<8x32xf32>
      %cst_80 = arith.constant dense<0.000000e+00> : vector<8xf32>
      %159 = vector.multi_reduction <add>, %158, %cst_80 [1] : vector<8x32xf32> to vector<8xf32>
      %160 = vector.shape_cast %159 : vector<8xf32> to vector<8x1xf32>
      %cst_81 = arith.constant 3.200000e+01 : f32
      %161 = vector.broadcast %cst_81 : f32 to vector<8x1xf32>
      %162 = arith.divf %160, %161 : vector<8x1xf32>
      %163 = vector.broadcast %155 : vector<8x1xf32> to vector<8x32xf32>
      %164 = arith.subf %149, %163 : vector<8x32xf32>
      %cst_82 = arith.constant 9.99999974E-6 : f32
      %165 = vector.broadcast %cst_82 : f32 to vector<8x1xf32>
      %166 = arith.addf %162, %165 : vector<8x1xf32>
      %167 = math.rsqrt %166 : vector<8x1xf32>
      %168 = vector.broadcast %167 : vector<8x1xf32> to vector<8x32xf32>
      %169 = arith.mulf %164, %168 : vector<8x32xf32>
      %170 = vector.broadcast %150 : vector<1x32xf32> to vector<8x32xf32>
      %171 = arith.mulf %169, %170 : vector<8x32xf32>
      %172 = vector.broadcast %151 : vector<1x32xf32> to vector<8x32xf32>
      %173 = arith.addf %171, %172 : vector<8x32xf32>
      %174 = arith.truncf %173 : vector<8x32xf32> to vector<8x32xbf16>
      %c0_83 = arith.constant 0 : index
      %c0_84 = arith.constant 0 : index
      %175 = vector.load %arg6[%c0_83, %c0_84] : memref<32x96xbf16, #tpu.memory_space<vmem>>, vector<32x96xbf16>
      %cst_85 = arith.constant dense<0.000000e+00> : vector<8x96xf32>
      %176 = tpu.matmul %174, %175, %cst_85 {dimension_numbers = #tpu.dot_dimension_numbers<[1], [0], [0], [1], [0, 0, 1, 1], [], []>} : vector<8x32xbf16>, vector<32x96xbf16>, vector<8x96xf32> -> vector<8x96xf32>
      %c0_86 = arith.constant 0 : index
      %c0_87 = arith.constant 0 : index
      %177 = vector.load %arg7[%c0_86, %c0_87] : memref<1x96xf32, #tpu.memory_space<vmem>>, vector<1x96xf32>
      %178 = vector.broadcast %177 : vector<1x96xf32> to vector<8x96xf32>
      %179 = arith.addf %176, %178 : vector<8x96xf32>
      %180 = vector.extract_strided_slice %179 {offsets = [0, 0], sizes = [8, 32], strides = [1, 1]} : vector<8x96xf32> to vector<8x32xf32>
      %cst_88 = arith.constant 0.353553385 : f32
      %181 = vector.broadcast %cst_88 : f32 to vector<8x32xf32>
      %182 = arith.mulf %180, %181 : vector<8x32xf32>
      %183 = arith.truncf %182 : vector<8x32xf32> to vector<8x32xbf16>
      %c0_89 = arith.constant 0 : index
      %c0_90 = arith.constant 0 : index
      %184 = vector.load %arg17[%c0_89, %c0_90] : memref<8x96xbf16, #tpu.memory_space<vmem>>, vector<8x32xbf16>
      tpu.vector_store %arg17[%c0_89, %c0_90], %183 {strides = array<i32>} : memref<8x96xbf16, #tpu.memory_space<vmem>>, vector<8x32xbf16>,
      %185 = vector.extract_strided_slice %179 {offsets = [0, 32], sizes = [8, 64], strides = [1, 1]} : vector<8x96xf32> to vector<8x64xf32>
      %186 = arith.truncf %185 : vector<8x64xf32> to vector<8x64xbf16>
      %c0_91 = arith.constant 0 : index
      %c32_92 = arith.constant 32 : index
      %187 = vector.load %arg17[%c0_91, %c32_92] : memref<8x96xbf16, #tpu.memory_space<vmem>>, vector<8x64xbf16>
      tpu.vector_store %arg17[%c0_91, %c32_92], %186 {strides = array<i32>} : memref<8x96xbf16, #tpu.memory_space<vmem>>, vector<8x64xbf16>,
    } else {
    }
    %c0 = arith.constant 0 : index
    %c0_1 = arith.constant 0 : index
    %c0_2 = arith.constant 0 : index
    %3 = vector.load %arg2[%c0, %c0_1, %c0_2] : memref<1x8x32xf32, #tpu.memory_space<vmem>>, vector<1x8x32xf32>
    %4 = vector.shape_cast %3 : vector<1x8x32xf32> to vector<8x32xf32>
    %c8_i32 = arith.constant 8 : i32
    %5 = arith.muli %arg1, %c8_i32 : i32
    %6 = tpu.assume_multiple %5, 8 : i32
    %7 = tpu.iota {dimensions = array<i32: 0>} : vector<8x8xi32>
    %8 = vector.broadcast %6 : i32 to vector<8x8xi32>
    %9 = arith.addi %7, %8 : vector<8x8xi32>
    %10 = tpu.iota {dimensions = array<i32: 1>} : vector<8x8xi32>
    %11 = arith.cmpi sge, %9, %10 : vector<8x8xi32>
    %12 = arith.index_cast %6 : i32 to index
    %c0_3 = arith.constant 0 : index
    %13 = vector.load %arg17[%12, %c0_3] : memref<8x96xbf16, #tpu.memory_space<vmem>>, vector<8x8xbf16>
    %c0_4 = arith.constant 0 : index
    %c32 = arith.constant 32 : index
    %14 = vector.load %arg17[%c0_4, %c32] : memref<8x96xbf16, #tpu.memory_space<vmem>>, vector<8x8xbf16>
    %c0_5 = arith.constant 0 : index
    %c64 = arith.constant 64 : index
    %15 = vector.load %arg17[%c0_5, %c64] : memref<8x96xbf16, #tpu.memory_space<vmem>>, vector<8x8xbf16>
    %cst = arith.constant dense<0.000000e+00> : vector<8x8xf32>
    %16 = tpu.matmul %13, %14, %cst {dimension_numbers = #tpu.dot_dimension_numbers<[1], [1], [0], [0], [0, 0, 1, 0], [], []>} : vector<8x8xbf16>, vector<8x8xbf16>, vector<8x8xf32> -> vector<8x8xf32>
    %cst_6 = arith.constant 0xFF800000 : f32
    %17 = vector.broadcast %cst_6 : f32 to vector<8x8xf32>
    %18 = arith.select %11, %16, %17 : vector<8x8xi1>, vector<8x8xf32>
    %cst_7 = arith.constant dense<0xFF800000> : vector<8xf32>
    %19 = vector.multi_reduction <maximumf>, %18, %cst_7 [1] : vector<8x8xf32> to vector<8xf32>
    %20 = vector.shape_cast %19 : vector<8xf32> to vector<8x1xf32>
    %21 = vector.broadcast %20 : vector<8x1xf32> to vector<8x8xf32>
    %22 = arith.subf %18, %21 : vector<8x8xf32>
    %23 = math.exp %22 : vector<8x8xf32>
    %cst_8 = arith.constant dense<0.000000e+00> : vector<8xf32>
    %24 = vector.multi_reduction <add>, %23, %cst_8 [1] : vector<8x8xf32> to vector<8xf32>
    %25 = vector.shape_cast %24 : vector<8xf32> to vector<8x1xf32>
    %26 = tpu.reciprocal %25 {approx = true} : vector<8x1xf32> -> vector<8x1xf32>
    %27 = vector.broadcast %26 : vector<8x1xf32> to vector<8x8xf32>
    %28 = arith.mulf %23, %27 : vector<8x8xf32>
    %29 = arith.truncf %28 : vector<8x8xf32> to vector<8x8xbf16>
    %cst_9 = arith.constant dense<0.000000e+00> : vector<8x8xf32>
    %30 = tpu.matmul %29, %15, %cst_9 {dimension_numbers = #tpu.dot_dimension_numbers<[1], [0], [0], [1], [0, 0, 1, 1], [], []>} : vector<8x8xbf16>, vector<8x8xbf16>, vector<8x8xf32> -> vector<8x8xf32>
    %c0_10 = arith.constant 0 : index
    %c0_11 = arith.constant 0 : index
    %31 = vector.load %arg18[%c0_10, %c0_11] : memref<8x32xf32, #tpu.memory_space<vmem>>, vector<8x8xf32>
    tpu.vector_store %arg18[%c0_10, %c0_11], %30 {strides = array<i32>} : memref<8x32xf32, #tpu.memory_space<vmem>>, vector<8x8xf32>,
    %32 = arith.index_cast %6 : i32 to index
    %c8 = arith.constant 8 : index
    %33 = vector.load %arg17[%32, %c8] : memref<8x96xbf16, #tpu.memory_space<vmem>>, vector<8x8xbf16>
    %c0_12 = arith.constant 0 : index
    %c40 = arith.constant 40 : index
    %34 = vector.load %arg17[%c0_12, %c40] : memref<8x96xbf16, #tpu.memory_space<vmem>>, vector<8x8xbf16>
    %c0_13 = arith.constant 0 : index
    %c72 = arith.constant 72 : index
    %35 = vector.load %arg17[%c0_13, %c72] : memref<8x96xbf16, #tpu.memory_space<vmem>>, vector<8x8xbf16>
    %cst_14 = arith.constant dense<0.000000e+00> : vector<8x8xf32>
    %36 = tpu.matmul %33, %34, %cst_14 {dimension_numbers = #tpu.dot_dimension_numbers<[1], [1], [0], [0], [0, 0, 1, 0], [], []>} : vector<8x8xbf16>, vector<8x8xbf16>, vector<8x8xf32> -> vector<8x8xf32>
    %cst_15 = arith.constant 0xFF800000 : f32
    %37 = vector.broadcast %cst_15 : f32 to vector<8x8xf32>
    %38 = arith.select %11, %36, %37 : vector<8x8xi1>, vector<8x8xf32>
    %cst_16 = arith.constant dense<0xFF800000> : vector<8xf32>
    %39 = vector.multi_reduction <maximumf>, %38, %cst_16 [1] : vector<8x8xf32> to vector<8xf32>
    %40 = vector.shape_cast %39 : vector<8xf32> to vector<8x1xf32>
    %41 = vector.broadcast %40 : vector<8x1xf32> to vector<8x8xf32>
    %42 = arith.subf %38, %41 : vector<8x8xf32>
    %43 = math.exp %42 : vector<8x8xf32>
    %cst_17 = arith.constant dense<0.000000e+00> : vector<8xf32>
    %44 = vector.multi_reduction <add>, %43, %cst_17 [1] : vector<8x8xf32> to vector<8xf32>
    %45 = vector.shape_cast %44 : vector<8xf32> to vector<8x1xf32>
    %46 = tpu.reciprocal %45 {approx = true} : vector<8x1xf32> -> vector<8x1xf32>
    %47 = vector.broadcast %46 : vector<8x1xf32> to vector<8x8xf32>
    %48 = arith.mulf %43, %47 : vector<8x8xf32>
    %49 = arith.truncf %48 : vector<8x8xf32> to vector<8x8xbf16>
    %cst_18 = arith.constant dense<0.000000e+00> : vector<8x8xf32>
    %50 = tpu.matmul %49, %35, %cst_18 {dimension_numbers = #tpu.dot_dimension_numbers<[1], [0], [0], [1], [0, 0, 1, 1], [], []>} : vector<8x8xbf16>, vector<8x8xbf16>, vector<8x8xf32> -> vector<8x8xf32>
    %c0_19 = arith.constant 0 : index
    %c8_20 = arith.constant 8 : index
    %51 = vector.load %arg18[%c0_19, %c8_20] : memref<8x32xf32, #tpu.memory_space<vmem>>, vector<8x8xf32>
    tpu.vector_store %arg18[%c0_19, %c8_20], %50 {strides = array<i32>} : memref<8x32xf32, #tpu.memory_space<vmem>>, vector<8x8xf32>,
    %52 = arith.index_cast %6 : i32 to index
    %c16 = arith.constant 16 : index
    %53 = vector.load %arg17[%52, %c16] : memref<8x96xbf16, #tpu.memory_space<vmem>>, vector<8x8xbf16>
    %c0_21 = arith.constant 0 : index
    %c48 = arith.constant 48 : index
    %54 = vector.load %arg17[%c0_21, %c48] : memref<8x96xbf16, #tpu.memory_space<vmem>>, vector<8x8xbf16>
    %c0_22 = arith.constant 0 : index
    %c80 = arith.constant 80 : index
    %55 = vector.load %arg17[%c0_22, %c80] : memref<8x96xbf16, #tpu.memory_space<vmem>>, vector<8x8xbf16>
    %cst_23 = arith.constant dense<0.000000e+00> : vector<8x8xf32>
    %56 = tpu.matmul %53, %54, %cst_23 {dimension_numbers = #tpu.dot_dimension_numbers<[1], [1], [0], [0], [0, 0, 1, 0], [], []>} : vector<8x8xbf16>, vector<8x8xbf16>, vector<8x8xf32> -> vector<8x8xf32>
    %cst_24 = arith.constant 0xFF800000 : f32
    %57 = vector.broadcast %cst_24 : f32 to vector<8x8xf32>
    %58 = arith.select %11, %56, %57 : vector<8x8xi1>, vector<8x8xf32>
    %cst_25 = arith.constant dense<0xFF800000> : vector<8xf32>
    %59 = vector.multi_reduction <maximumf>, %58, %cst_25 [1] : vector<8x8xf32> to vector<8xf32>
    %60 = vector.shape_cast %59 : vector<8xf32> to vector<8x1xf32>
    %61 = vector.broadcast %60 : vector<8x1xf32> to vector<8x8xf32>
    %62 = arith.subf %58, %61 : vector<8x8xf32>
    %63 = math.exp %62 : vector<8x8xf32>
    %cst_26 = arith.constant dense<0.000000e+00> : vector<8xf32>
    %64 = vector.multi_reduction <add>, %63, %cst_26 [1] : vector<8x8xf32> to vector<8xf32>
    %65 = vector.shape_cast %64 : vector<8xf32> to vector<8x1xf32>
    %66 = tpu.reciprocal %65 {approx = true} : vector<8x1xf32> -> vector<8x1xf32>
    %67 = vector.broadcast %66 : vector<8x1xf32> to vector<8x8xf32>
    %68 = arith.mulf %63, %67 : vector<8x8xf32>
    %69 = arith.truncf %68 : vector<8x8xf32> to vector<8x8xbf16>
    %cst_27 = arith.constant dense<0.000000e+00> : vector<8x8xf32>
    %70 = tpu.matmul %69, %55, %cst_27 {dimension_numbers = #tpu.dot_dimension_numbers<[1], [0], [0], [1], [0, 0, 1, 1], [], []>} : vector<8x8xbf16>, vector<8x8xbf16>, vector<8x8xf32> -> vector<8x8xf32>
    %c0_28 = arith.constant 0 : index
    %c16_29 = arith.constant 16 : index
    %71 = vector.load %arg18[%c0_28, %c16_29] : memref<8x32xf32, #tpu.memory_space<vmem>>, vector<8x8xf32>
    tpu.vector_store %arg18[%c0_28, %c16_29], %70 {strides = array<i32>} : memref<8x32xf32, #tpu.memory_space<vmem>>, vector<8x8xf32>,
    %72 = arith.index_cast %6 : i32 to index
    %c24 = arith.constant 24 : index
    %73 = vector.load %arg17[%72, %c24] : memref<8x96xbf16, #tpu.memory_space<vmem>>, vector<8x8xbf16>
    %c0_30 = arith.constant 0 : index
    %c56 = arith.constant 56 : index
    %74 = vector.load %arg17[%c0_30, %c56] : memref<8x96xbf16, #tpu.memory_space<vmem>>, vector<8x8xbf16>
    %c0_31 = arith.constant 0 : index
    %c88 = arith.constant 88 : index
    %75 = vector.load %arg17[%c0_31, %c88] : memref<8x96xbf16, #tpu.memory_space<vmem>>, vector<8x8xbf16>
    %cst_32 = arith.constant dense<0.000000e+00> : vector<8x8xf32>
    %76 = tpu.matmul %73, %74, %cst_32 {dimension_numbers = #tpu.dot_dimension_numbers<[1], [1], [0], [0], [0, 0, 1, 0], [], []>} : vector<8x8xbf16>, vector<8x8xbf16>, vector<8x8xf32> -> vector<8x8xf32>
    %cst_33 = arith.constant 0xFF800000 : f32
    %77 = vector.broadcast %cst_33 : f32 to vector<8x8xf32>
    %78 = arith.select %11, %76, %77 : vector<8x8xi1>, vector<8x8xf32>
    %cst_34 = arith.constant dense<0xFF800000> : vector<8xf32>
    %79 = vector.multi_reduction <maximumf>, %78, %cst_34 [1] : vector<8x8xf32> to vector<8xf32>
    %80 = vector.shape_cast %79 : vector<8xf32> to vector<8x1xf32>
    %81 = vector.broadcast %80 : vector<8x1xf32> to vector<8x8xf32>
    %82 = arith.subf %78, %81 : vector<8x8xf32>
    %83 = math.exp %82 : vector<8x8xf32>
    %cst_35 = arith.constant dense<0.000000e+00> : vector<8xf32>
    %84 = vector.multi_reduction <add>, %83, %cst_35 [1] : vector<8x8xf32> to vector<8xf32>
    %85 = vector.shape_cast %84 : vector<8xf32> to vector<8x1xf32>
    %86 = tpu.reciprocal %85 {approx = true} : vector<8x1xf32> -> vector<8x1xf32>
    %87 = vector.broadcast %86 : vector<8x1xf32> to vector<8x8xf32>
    %88 = arith.mulf %83, %87 : vector<8x8xf32>
    %89 = arith.truncf %88 : vector<8x8xf32> to vector<8x8xbf16>
    %cst_36 = arith.constant dense<0.000000e+00> : vector<8x8xf32>
    %90 = tpu.matmul %89, %75, %cst_36 {dimension_numbers = #tpu.dot_dimension_numbers<[1], [0], [0], [1], [0, 0, 1, 1], [], []>} : vector<8x8xbf16>, vector<8x8xbf16>, vector<8x8xf32> -> vector<8x8xf32>
    %c0_37 = arith.constant 0 : index
    %c24_38 = arith.constant 24 : index
    %91 = vector.load %arg18[%c0_37, %c24_38] : memref<8x32xf32, #tpu.memory_space<vmem>>, vector<8x8xf32>
    tpu.vector_store %arg18[%c0_37, %c24_38], %90 {strides = array<i32>} : memref<8x32xf32, #tpu.memory_space<vmem>>, vector<8x8xf32>,
    %c0_39 = arith.constant 0 : index
    %c0_40 = arith.constant 0 : index
    %92 = vector.load %arg18[%c0_39, %c0_40] : memref<8x32xf32, #tpu.memory_space<vmem>>, vector<8x32xf32>
    %93 = arith.truncf %92 : vector<8x32xf32> to vector<8x32xbf16>
    %c0_41 = arith.constant 0 : index
    %c0_42 = arith.constant 0 : index
    %94 = vector.load %arg8[%c0_41, %c0_42] : memref<32x32xbf16, #tpu.memory_space<vmem>>, vector<32x32xbf16>
    %cst_43 = arith.constant dense<0.000000e+00> : vector<8x32xf32>
    %95 = tpu.matmul %93, %94, %cst_43 {dimension_numbers = #tpu.dot_dimension_numbers<[1], [0], [0], [1], [0, 0, 1, 1], [], []>} : vector<8x32xbf16>, vector<32x32xbf16>, vector<8x32xf32> -> vector<8x32xf32>
    %c0_44 = arith.constant 0 : index
    %c0_45 = arith.constant 0 : index
    %96 = vector.load %arg9[%c0_44, %c0_45] : memref<1x32xf32, #tpu.memory_space<vmem>>, vector<1x32xf32>
    %97 = vector.broadcast %96 : vector<1x32xf32> to vector<8x32xf32>
    %98 = arith.addf %95, %97 : vector<8x32xf32>
    %99 = arith.addf %4, %98 : vector<8x32xf32>
    %c0_46 = arith.constant 0 : index
    %c0_47 = arith.constant 0 : index
    %100 = vector.load %arg10[%c0_46, %c0_47] : memref<1x32xf32, #tpu.memory_space<vmem>>, vector<1x32xf32>
    %c0_48 = arith.constant 0 : index
    %c0_49 = arith.constant 0 : index
    %101 = vector.load %arg11[%c0_48, %c0_49] : memref<1x32xf32, #tpu.memory_space<vmem>>, vector<1x32xf32>
    %cst_50 = arith.constant dense<0.000000e+00> : vector<8xf32>
    %102 = vector.multi_reduction <add>, %99, %cst_50 [1] : vector<8x32xf32> to vector<8xf32>
    %103 = vector.shape_cast %102 : vector<8xf32> to vector<8x1xf32>
    %cst_51 = arith.constant 3.200000e+01 : f32
    %104 = vector.broadcast %cst_51 : f32 to vector<8x1xf32>
    %105 = arith.divf %103, %104 : vector<8x1xf32>
    %106 = vector.broadcast %105 : vector<8x1xf32> to vector<8x32xf32>
    %107 = arith.subf %99, %106 : vector<8x32xf32>
    %108 = arith.mulf %107, %107 : vector<8x32xf32>
    %cst_52 = arith.constant dense<0.000000e+00> : vector<8xf32>
    %109 = vector.multi_reduction <add>, %108, %cst_52 [1] : vector<8x32xf32> to vector<8xf32>
    %110 = vector.shape_cast %109 : vector<8xf32> to vector<8x1xf32>
    %cst_53 = arith.constant 3.200000e+01 : f32
    %111 = vector.broadcast %cst_53 : f32 to vector<8x1xf32>
    %112 = arith.divf %110, %111 : vector<8x1xf32>
    %113 = vector.broadcast %105 : vector<8x1xf32> to vector<8x32xf32>
    %114 = arith.subf %99, %113 : vector<8x32xf32>
    %cst_54 = arith.constant 9.99999974E-6 : f32
    %115 = vector.broadcast %cst_54 : f32 to vector<8x1xf32>
    %116 = arith.addf %112, %115 : vector<8x1xf32>
    %117 = math.rsqrt %116 : vector<8x1xf32>
    %118 = vector.broadcast %117 : vector<8x1xf32> to vector<8x32xf32>
    %119 = arith.mulf %114, %118 : vector<8x32xf32>
    %120 = vector.broadcast %100 : vector<1x32xf32> to vector<8x32xf32>
    %121 = arith.mulf %119, %120 : vector<8x32xf32>
    %122 = vector.broadcast %101 : vector<1x32xf32> to vector<8x32xf32>
    %123 = arith.addf %121, %122 : vector<8x32xf32>
    %124 = arith.truncf %123 : vector<8x32xf32> to vector<8x32xbf16>
    %c0_55 = arith.constant 0 : index
    %c0_56 = arith.constant 0 : index
    %125 = vector.load %arg12[%c0_55, %c0_56] : memref<32x128xbf16, #tpu.memory_space<vmem>>, vector<32x128xbf16>
    %cst_57 = arith.constant dense<0.000000e+00> : vector<8x128xf32>
    %126 = tpu.matmul %124, %125, %cst_57 {dimension_numbers = #tpu.dot_dimension_numbers<[1], [0], [0], [1], [0, 0, 1, 1], [], []>} : vector<8x32xbf16>, vector<32x128xbf16>, vector<8x128xf32> -> vector<8x128xf32>
    %c0_58 = arith.constant 0 : index
    %c0_59 = arith.constant 0 : index
    %127 = vector.load %arg13[%c0_58, %c0_59] : memref<1x128xf32, #tpu.memory_space<vmem>>, vector<1x128xf32>
    %128 = vector.broadcast %127 : vector<1x128xf32> to vector<8x128xf32>
    %129 = arith.addf %126, %128 : vector<8x128xf32>
    %cst_60 = arith.constant 5.000000e-01 : f32
    %130 = vector.broadcast %cst_60 : f32 to vector<8x128xf32>
    %131 = arith.mulf %130, %129 : vector<8x128xf32>
    %cst_61 = arith.constant 0.707106769 : f32
    %132 = vector.broadcast %cst_61 : f32 to vector<8x128xf32>
    %133 = arith.mulf %129, %132 : vector<8x128xf32>
    %134 = math.erf %133 : vector<8x128xf32>
    %cst_62 = arith.constant 1.000000e+00 : f32
    %135 = vector.broadcast %cst_62 : f32 to vector<8x128xf32>
    %136 = arith.addf %135, %134 : vector<8x128xf32>
    %137 = arith.mulf %131, %136 : vector<8x128xf32>
    %138 = arith.truncf %137 : vector<8x128xf32> to vector<8x128xbf16>
    %c0_63 = arith.constant 0 : index
    %c0_64 = arith.constant 0 : index
    %139 = vector.load %arg14[%c0_63, %c0_64] : memref<128x32xbf16, #tpu.memory_space<vmem>>, vector<128x32xbf16>
    %cst_65 = arith.constant dense<0.000000e+00> : vector<8x32xf32>
    %140 = tpu.matmul %138, %139, %cst_65 {dimension_numbers = #tpu.dot_dimension_numbers<[1], [0], [0], [1], [0, 0, 1, 1], [], []>} : vector<8x128xbf16>, vector<128x32xbf16>, vector<8x32xf32> -> vector<8x32xf32>
    %c0_66 = arith.constant 0 : index
    %c0_67 = arith.constant 0 : index
    %141 = vector.load %arg15[%c0_66, %c0_67] : memref<1x32xf32, #tpu.memory_space<vmem>>, vector<1x32xf32>
    %142 = vector.broadcast %141 : vector<1x32xf32> to vector<8x32xf32>
    %143 = arith.addf %140, %142 : vector<8x32xf32>
    %144 = arith.addf %99, %143 : vector<8x32xf32>
    %c0_68 = arith.constant 0 : index
    %c0_69 = arith.constant 0 : index
    %c0_70 = arith.constant 0 : index
    %145 = vector.load %arg16[%c0_68, %c0_69, %c0_70] : memref<1x8x32xf32, #tpu.memory_space<vmem>>, vector<1x8x32xf32>
    %146 = vector.shape_cast %145 : vector<1x8x32xf32> to vector<8x32xf32>
    %147 = vector.shape_cast %144 : vector<8x32xf32> to vector<1x8x32xf32>
    tpu.vector_store %arg16[%c0_68, %c0_69, %c0_70], %147 {strides = array<i32>} : memref<1x8x32xf32, #tpu.memory_space<vmem>>, vector<1x8x32xf32>,
    return
  }
  func.func @transform_0(%arg0: i32, %arg1: i32) -> (i32, i32, i32) {
    %c0_i32 = arith.constant 0 : i32
    %c0_i32_0 = arith.constant 0 : i32
    return %arg0, %arg1, %c0_i32 : i32, i32, i32
  }
  func.func @transform_1(%arg0: i32, %arg1: i32) -> (i32, i32, i32) {
    %c0_i32 = arith.constant 0 : i32
    %c0_i32_0 = arith.constant 0 : i32
    %c0_i32_1 = arith.constant 0 : i32
    return %arg0, %c0_i32, %c0_i32_0 : i32, i32, i32
  }
  func.func @transform_2(%arg0: i32, %arg1: i32) -> (i32, i32) {
    %c0_i32 = arith.constant 0 : i32
    %c0_i32_0 = arith.constant 0 : i32
    %c0_i32_1 = arith.constant 0 : i32
    return %c0_i32, %c0_i32_0 : i32, i32
  }
  func.func @transform_3(%arg0: i32, %arg1: i32) -> (i32, i32) {
    %c0_i32 = arith.constant 0 : i32
    %c0_i32_0 = arith.constant 0 : i32
    %c0_i32_1 = arith.constant 0 : i32
    return %c0_i32, %c0_i32_0 : i32, i32
  }
  func.func @transform_4(%arg0: i32, %arg1: i32) -> (i32, i32) {
    %c0_i32 = arith.constant 0 : i32
    %c0_i32_0 = arith.constant 0 : i32
    %c0_i32_1 = arith.constant 0 : i32
    return %c0_i32, %c0_i32_0 : i32, i32
  }
  func.func @transform_5(%arg0: i32, %arg1: i32) -> (i32, i32) {
    %c0_i32 = arith.constant 0 : i32
    %c0_i32_0 = arith.constant 0 : i32
    %c0_i32_1 = arith.constant 0 : i32
    return %c0_i32, %c0_i32_0 : i32, i32
  }
  func.func @transform_6(%arg0: i32, %arg1: i32) -> (i32, i32) {
    %c0_i32 = arith.constant 0 : i32
    %c0_i32_0 = arith.constant 0 : i32
    %c0_i32_1 = arith.constant 0 : i32
    return %c0_i32, %c0_i32_0 : i32, i32
  }
  func.func @transform_7(%arg0: i32, %arg1: i32) -> (i32, i32) {
    %c0_i32 = arith.constant 0 : i32
    %c0_i32_0 = arith.constant 0 : i32
    %c0_i32_1 = arith.constant 0 : i32
    return %c0_i32, %c0_i32_0 : i32, i32
  }
  func.func @transform_8(%arg0: i32, %arg1: i32) -> (i32, i32) {
    %c0_i32 = arith.constant 0 : i32
    %c0_i32_0 = arith.constant 0 : i32
    %c0_i32_1 = arith.constant 0 : i32
    return %c0_i32, %c0_i32_0 : i32, i32
  }
  func.func @transform_9(%arg0: i32, %arg1: i32) -> (i32, i32) {
    %c0_i32 = arith.constant 0 : i32
    %c0_i32_0 = arith.constant 0 : i32
    %c0_i32_1 = arith.constant 0 : i32
    return %c0_i32, %c0_i32_0 : i32, i32
  }
  func.func @transform_10(%arg0: i32, %arg1: i32) -> (i32, i32) {
    %c0_i32 = arith.constant 0 : i32
    %c0_i32_0 = arith.constant 0 : i32
    %c0_i32_1 = arith.constant 0 : i32
    return %c0_i32, %c0_i32_0 : i32, i32
  }
  func.func @transform_11(%arg0: i32, %arg1: i32) -> (i32, i32) {
    %c0_i32 = arith.constant 0 : i32
    %c0_i32_0 = arith.constant 0 : i32
    %c0_i32_1 = arith.constant 0 : i32
    return %c0_i32, %c0_i32_0 : i32, i32
  }
  func.func @transform_12(%arg0: i32, %arg1: i32) -> (i32, i32) {
    %c0_i32 = arith.constant 0 : i32
    %c0_i32_0 = arith.constant 0 : i32
    %c0_i32_1 = arith.constant 0 : i32
    return %c0_i32, %c0_i32_0 : i32, i32
  }
  func.func @transform_13(%arg0: i32, %arg1: i32) -> (i32, i32) {
    %c0_i32 = arith.constant 0 : i32
    %c0_i32_0 = arith.constant 0 : i32
    %c0_i32_1 = arith.constant 0 : i32
    return %c0_i32, %c0_i32_0 : i32, i32
  }
  func.func @transform_14(%arg0: i32, %arg1: i32) -> (i32, i32, i32) {
    %c0_i32 = arith.constant 0 : i32
    %c0_i32_0 = arith.constant 0 : i32
    return %arg0, %arg1, %c0_i32 : i32, i32, i32
  }
}

</mosaic_0001>

<llo_original>
// kernel: tpu_custom_call.1
$region0: #{tpu_custom_call.1}
  #allocation0 [shape = 'u32[]', space=smem, size = 0x4, offset = 0x4, fixed_abs, tag = 'smem constant byte address 0x4 - core index']
  #allocation1 [shape = 'u32[144,128]{1,0:T(1,128)}', space=vmem, size = 0x12000, scoped, tag = 'internal scratch']
  #allocation2 [shape = 'bf16[8,96]{1,0:T(8,128)(2,1)}', space=vmem, size = 0x800, scoped, tag = 'scratch operand']
  #allocation3 [shape = 'f32[8,32]{1,0:T(8,128)}', space=vmem, size = 0x1000, scoped, tag = 'scratch operand']
  %s0 = inlined_call_operand.vmem [shape: f32[2,8,32], index: 0, kind: input, shape index: {}]
  %s1 = inlined_call_operand.vmem [shape: f32[2,8,32], index: 1, kind: input, shape index: {}]
  %s2 = inlined_call_operand.vmem [shape: f32[1,32], index: 2, kind: input, shape index: {}]
  %s3 = inlined_call_operand.vmem [shape: f32[1,32], index: 3, kind: input, shape index: {}]
  %s4 = inlined_call_operand.vmem [shape: bf16[32,96], index: 4, kind: input, shape index: {}]
  %s5 = inlined_call_operand.vmem [shape: f32[1,96], index: 5, kind: input, shape index: {}]
  %s6 = inlined_call_operand.vmem [shape: bf16[32,32], index: 6, kind: input, shape index: {}]
  %s7 = inlined_call_operand.vmem [shape: f32[1,32], index: 7, kind: input, shape index: {}]
  %s8 = inlined_call_operand.vmem [shape: f32[1,32], index: 8, kind: input, shape index: {}]
  %s9 = inlined_call_operand.hbm [shape: f32[1,32], index: 9, kind: input, shape index: {}]
  %s10 = inlined_call_operand.vmem [shape: bf16[32,128], index: 10, kind: input, shape index: {}]
  %s11 = inlined_call_operand.hbm [shape: f32[1,128], index: 11, kind: input, shape index: {}]
  %s12 = inlined_call_operand.vmem [shape: bf16[128,32], index: 12, kind: input, shape index: {}]
  %s13 = inlined_call_operand.vmem [shape: f32[1,32], index: 13, kind: input, shape index: {}]
  %s14 = inlined_call_operand.hbm [shape: f32[2,8,32], index: 14, kind: output, shape index: {}]
  %s15 = sld [smem:[#allocation0]]
  $region101: #{tpu_custom_call.1} parent=0
    _
  %s17 = ssub.s32 1, %s15
  %s18 = scalar_select 0, %s17, %s15
  $region1: #{tpu_custom_call.1} parent=0
    #allocation4 [shape = 'u8[512]{0}', space=vmem, size = 0x400, scoped, tag = 'input window, operand 9, single buffered']
    #allocation5 [shape = 's32[2]{0}', space=sflag, size = 0x8, scoped, tag = 'scoped memory for tpu_custom_call.1']
    #allocation6 [shape = 's32[2]{0}', space=sflag, size = 0x8, scoped, tag = 'scoped memory for tpu_custom_call.1']
    #allocation7 [shape = 'u8[512]{0}', space=vmem, size = 0x400, scoped, tag = 'input window, operand 11, single buffered']
    #allocation8 [shape = 's32[1]{0}', space=sflag, size = 0x4, scoped, tag = 'scoped memory for tpu_custom_call.1']
    #allocation9 [shape = 'u8[8192]{0}', space=vmem, size = 0x2000, scoped, tag = 'output window, operand 0']
    %19 = vsyncpa [#allocation5], 0
    %20 = vsyncpa [#allocation8], 0
    %21 = vsyncpa [#allocation6], 0
    %s22 = scalar_lea.sflag [#allocation6], 1
    %23 = vsyncpa %s22, 0
    loop: start=0, step=1, limit=4
    $region2: #{tpu_custom_call.1} parent=1 // loop_pre_header
      _
    $region3: #{tpu_custom_call.1} parent=1 // loop_header
      %s25 = sphi 0, %s29
      %p26 = scmp.ge.s32.totalorder %s25, 4
      %s32 = sphi 0, %s44
      %s33 = sphi 0, %s40
      %s34 = sphi 0, %s32
      %s35 = sphi 0, %s33
      %s36 = sphi 0, %s34
      %s37 = sphi 0, %s35
      %s49 = sphi 0, %s51
      %s52 = sphi 0, %s49
      %s53 = sphi 0, %s52
      %s69 = sphi 0, %s53
      %s75 = sphi 0, %s77
      %s78 = sphi 0, %s75
      %s79 = sphi 0, %s78
      %s95 = sphi 0, %s79
      %s99 = sphi 0, %s99
      %s101 = sphi 0, %s99
      %s102 = sphi 0, %s101
      %s116 = sphi 0, %s102
      %s120 = sphi 0, %s120
      %s122 = sphi 0, %s120
      %s123 = sphi 0, %s122
      %s137 = sphi 0, %s123
      %s141 = sphi 0, %s141
      %s143 = sphi 0, %s141
      %s144 = sphi 0, %s143
      %s158 = sphi 0, %s144
      %s162 = sphi 0, %s162
      %s164 = sphi 0, %s162
      %s165 = sphi 0, %s164
      %s179 = sphi 0, %s165
      %s183 = sphi 0, %s183
      %s185 = sphi 0, %s183
      %s186 = sphi 0, %s185
      %s200 = sphi 0, %s186
      %s204 = sphi 0, %s204
      %s206 = sphi 0, %s204
      %s207 = sphi 0, %s206
      %s221 = sphi 0, %s207
      %s225 = sphi 0, %s225
      %s227 = sphi 0, %s225
      %s228 = sphi 0, %s227
      %s242 = sphi 0, %s228
      %s246 = sphi 0, %s246
      %s248 = sphi 0, %s246
      %s249 = sphi 0, %s248
      %s263 = sphi 0, %s249
      %s267 = sphi 0, %s267
      %s269 = sphi 0, %s267
      %s270 = sphi 0, %s269
      %s284 = sphi 0, %s270
      %s288 = sphi 0, %s288
      %s290 = sphi 0, %s288
      %s291 = sphi 0, %s290
      %s305 = sphi 0, %s291
      %s309 = sphi 0, %s309
      %s311 = sphi 0, %s309
      %s312 = sphi 0, %s311
      %s326 = sphi 0, %s312
      %s330 = sphi 0, %s330
      %s332 = sphi 0, %s330
      %s333 = sphi 0, %s332
      %s347 = sphi 0, %s333
      %s355 = sphi 0, %s357
      %s358 = sphi 0, %s355
      %s359 = sphi 0, %s358
      %s375 = sphi 0, %s359
    $region4: #{tpu_custom_call.1} parent=1 // loop_header_branch
      %28 = sbr.rel (%p26) target = $region8
    $region5: #{tpu_custom_call.1} parent=1 // loop_body
      %s30 = ssub.s32 %s25, 1
      %s31 = ssub.s32 %s25, 2
      %s38 = sadd.s32 1, %s33
      %p39 = scmp.ge.s32.totalorder %s38, 1
      %s40 = scalar_select %p39, 0, %s38
      %s41 = sadd.s32 1, %s32
      %s42 = scalar_select %p39, %s41, %s32
      %p43 = scmp.ge.s32.totalorder %s42, 2
      %s44 = scalar_select %p43, 0, %s42
      %s45 = ssub.s32 %s32, %s44
      %s46 = ssub.s32 %s33, %s40
      %s47 = sor.u32 %s45, %s46
      %p48 = scmp.eq.s32.totalorder %s47, 0
      %s50 = sadd.s32 %s49, 1
      %s51 = scalar_select %p48, %s49, %s50
      %p54 = pneg %p48
      %p55 = scmp.eq.s32.totalorder %s25, 1
      %p56 = por %p54, %p55
      %p57 = scmp.ne.s32.totalorder %s49, %s52
      %p58 = scmp.eq.s32.totalorder %s25, 0
      %p59 = por %p57, %p58
      %p60 = scmp.ne.s32.totalorder %s49, %s52
      %p61 = scmp.eq.s32.totalorder %s30, 1
      %p62 = por %p60, %p61
      %p63 = scmp.ne.s32.totalorder %s52, %s53
      %p64 = scmp.eq.s32.totalorder %s30, 0
      %p65 = por %p63, %p64
      %p66 = scmp.ne.s32.totalorder %s52, %s53
      %p67 = scmp.eq.s32.totalorder %s31, 1
      %p68 = por %p66, %p67
      %p70 = scmp.ne.s32.totalorder %s53, %s69
      %p71 = scmp.eq.s32.totalorder %s31, 0
      %p72 = por %p70, %p71
      %s73 = ssub.s32 %s32, %s44
      %p74 = scmp.eq.s32.totalorder %s73, 0
      %s76 = sadd.s32 %s75, 1
      %s77 = scalar_select %p74, %s75, %s76
      %p80 = pneg %p74
      %p81 = scmp.eq.s32.totalorder %s25, 1
      %p82 = por %p80, %p81
      %p83 = scmp.ne.s32.totalorder %s75, %s78
      %p84 = scmp.eq.s32.totalorder %s25, 0
      %p85 = por %p83, %p84
      %p86 = scmp.ne.s32.totalorder %s75, %s78
      %p87 = scmp.eq.s32.totalorder %s30, 1
      %p88 = por %p86, %p87
      %p89 = scmp.ne.s32.totalorder %s78, %s79
      %p90 = scmp.eq.s32.totalorder %s30, 0
      %p91 = por %p89, %p90
      %p92 = scmp.ne.s32.totalorder %s78, %s79
      %p93 = scmp.eq.s32.totalorder %s31, 1
      %p94 = por %p92, %p93
      %p96 = scmp.ne.s32.totalorder %s79, %s95
      %p97 = scmp.eq.s32.totalorder %s31, 0
      %p98 = por %p96, %p97
      %s100 = sadd.s32 %s99, 1
      %p103 = scmp.eq.s32.totalorder %s25, 1
      %p104 = scmp.ne.s32.totalorder %s99, %s101
      %p105 = scmp.eq.s32.totalorder %s25, 0
      %p106 = por %p104, %p105
      %p107 = scmp.ne.s32.totalorder %s99, %s101
      %p108 = scmp.eq.s32.totalorder %s30, 1
      %p109 = por %p107, %p108
      %p110 = scmp.ne.s32.totalorder %s101, %s102
      %p111 = scmp.eq.s32.totalorder %s30, 0
      %p112 = por %p110, %p111
      %p113 = scmp.ne.s32.totalorder %s101, %s102
      %p114 = scmp.eq.s32.totalorder %s31, 1
      %p115 = por %p113, %p114
      %p117 = scmp.ne.s32.totalorder %s102, %s116
      %p118 = scmp.eq.s32.totalorder %s31, 0
      %p119 = por %p117, %p118
      %s121 = sadd.s32 %s120, 1
      %p124 = scmp.eq.s32.totalorder %s25, 1
      %p125 = scmp.ne.s32.totalorder %s120, %s122
      %p126 = scmp.eq.s32.totalorder %s25, 0
      %p127 = por %p125, %p126
      %p128 = scmp.ne.s32.totalorder %s120, %s122
      %p129 = scmp.eq.s32.totalorder %s30, 1
      %p130 = por %p128, %p129
      %p131 = scmp.ne.s32.totalorder %s122, %s123
      %p132 = scmp.eq.s32.totalorder %s30, 0
      %p133 = por %p131, %p132
      %p134 = scmp.ne.s32.totalorder %s122, %s123
      %p135 = scmp.eq.s32.totalorder %s31, 1
      %p136 = por %p134, %p135
      %p138 = scmp.ne.s32.totalorder %s123, %s137
      %p139 = scmp.eq.s32.totalorder %s31, 0
      %p140 = por %p138, %p139
      %s142 = sadd.s32 %s141, 1
      %p145 = scmp.eq.s32.totalorder %s25, 1
      %p146 = scmp.ne.s32.totalorder %s141, %s143
      %p147 = scmp.eq.s32.totalorder %s25, 0
      %p148 = por %p146, %p147
      %p149 = scmp.ne.s32.totalorder %s141, %s143
      %p150 = scmp.eq.s32.totalorder %s30, 1
      %p151 = por %p149, %p150
      %p152 = scmp.ne.s32.totalorder %s143, %s144
      %p153 = scmp.eq.s32.totalorder %s30, 0
      %p154 = por %p152, %p153
      %p155 = scmp.ne.s32.totalorder %s143, %s144
      %p156 = scmp.eq.s32.totalorder %s31, 1
      %p157 = por %p155, %p156
      %p159 = scmp.ne.s32.totalorder %s144, %s158
      %p160 = scmp.eq.s32.totalorder %s31, 0
      %p161 = por %p159, %p160
      %s163 = sadd.s32 %s162, 1
      %p166 = scmp.eq.s32.totalorder %s25, 1
      %p167 = scmp.ne.s32.totalorder %s162, %s164
      %p168 = scmp.eq.s32.totalorder %s25, 0
      %p169 = por %p167, %p168
      %p170 = scmp.ne.s32.totalorder %s162, %s164
      %p171 = scmp.eq.s32.totalorder %s30, 1
      %p172 = por %p170, %p171
      %p173 = scmp.ne.s32.totalorder %s164, %s165
      %p174 = scmp.eq.s32.totalorder %s30, 0
      %p175 = por %p173, %p174
      %p176 = scmp.ne.s32.totalorder %s164, %s165
      %p177 = scmp.eq.s32.totalorder %s31, 1
      %p178 = por %p176, %p177
      %p180 = scmp.ne.s32.totalorder %s165, %s179
      %p181 = scmp.eq.s32.totalorder %s31, 0
      %p182 = por %p180, %p181
      %s184 = sadd.s32 %s183, 1
      %p187 = scmp.eq.s32.totalorder %s25, 1
      %p188 = scmp.ne.s32.totalorder %s183, %s185
      %p189 = scmp.eq.s32.totalorder %s25, 0
      %p190 = por %p188, %p189
      %p191 = scmp.ne.s32.totalorder %s183, %s185
      %p192 = scmp.eq.s32.totalorder %s30, 1
      %p193 = por %p191, %p192
      %p194 = scmp.ne.s32.totalorder %s185, %s186
      %p195 = scmp.eq.s32.totalorder %s30, 0
      %p196 = por %p194, %p195
      %p197 = scmp.ne.s32.totalorder %s185, %s186
      %p198 = scmp.eq.s32.totalorder %s31, 1
      %p199 = por %p197, %p198
      %p201 = scmp.ne.s32.totalorder %s186, %s200
      %p202 = scmp.eq.s32.totalorder %s31, 0
      %p203 = por %p201, %p202
      %s205 = sadd.s32 %s204, 1
      %p208 = scmp.eq.s32.totalorder %s25, 1
      %p209 = scmp.ne.s32.totalorder %s204, %s206
      %p210 = scmp.eq.s32.totalorder %s25, 0
      %p211 = por %p209, %p210
      %p212 = scmp.ne.s32.totalorder %s204, %s206
      %p213 = scmp.eq.s32.totalorder %s30, 1
      %p214 = por %p212, %p213
      %p215 = scmp.ne.s32.totalorder %s206, %s207
      %p216 = scmp.eq.s32.totalorder %s30, 0
      %p217 = por %p215, %p216
      %p218 = scmp.ne.s32.totalorder %s206, %s207
      %p219 = scmp.eq.s32.totalorder %s31, 1
      %p220 = por %p218, %p219
      %p222 = scmp.ne.s32.totalorder %s207, %s221
      %p223 = scmp.eq.s32.totalorder %s31, 0
      %p224 = por %p222, %p223
      %s226 = sadd.s32 %s225, 1
      %p229 = scmp.eq.s32.totalorder %s25, 1
      %p230 = scmp.ne.s32.totalorder %s225, %s227
      %p231 = scmp.eq.s32.totalorder %s25, 0
      %p232 = por %p230, %p231
      %p233 = scmp.ne.s32.totalorder %s225, %s227
      %p234 = scmp.eq.s32.totalorder %s30, 1
      %p235 = por %p233, %p234
      %p236 = scmp.ne.s32.totalorder %s227, %s228
      %p237 = scmp.eq.s32.totalorder %s30, 0
      %p238 = por %p236, %p237
      %p239 = scmp.ne.s32.totalorder %s227, %s228
      %p240 = scmp.eq.s32.totalorder %s31, 1
      %p241 = por %p239, %p240
      %p243 = scmp.ne.s32.totalorder %s228, %s242
      %p244 = scmp.eq.s32.totalorder %s31, 0
      %p245 = por %p243, %p244
      %s247 = sadd.s32 %s246, 1
      %p250 = scmp.eq.s32.totalorder %s25, 1
      %p251 = scmp.ne.s32.totalorder %s246, %s248
      %p252 = scmp.eq.s32.totalorder %s25, 0
      %p253 = por %p251, %p252
      %p254 = scmp.ne.s32.totalorder %s246, %s248
      %p255 = scmp.eq.s32.totalorder %s30, 1
      %p256 = por %p254, %p255
      %p257 = scmp.ne.s32.totalorder %s248, %s249
      %p258 = scmp.eq.s32.totalorder %s30, 0
      %p259 = por %p257, %p258
      %p260 = scmp.ne.s32.totalorder %s248, %s249
      %p261 = scmp.eq.s32.totalorder %s31, 1
      %p262 = por %p260, %p261
      %p264 = scmp.ne.s32.totalorder %s249, %s263
      %p265 = scmp.eq.s32.totalorder %s31, 0
      %p266 = por %p264, %p265
      %s268 = sadd.s32 %s267, 1
      %p271 = scmp.eq.s32.totalorder %s25, 1
      %p272 = scmp.ne.s32.totalorder %s267, %s269
      %p273 = scmp.eq.s32.totalorder %s25, 0
      %p274 = por %p272, %p273
      %p275 = scmp.ne.s32.totalorder %s267, %s269
      %p276 = scmp.eq.s32.totalorder %s30, 1
      %p277 = por %p275, %p276
      %p278 = scmp.ne.s32.totalorder %s269, %s270
      %p279 = scmp.eq.s32.totalorder %s30, 0
      %p280 = por %p278, %p279
      %p281 = scmp.ne.s32.totalorder %s269, %s270
      %p282 = scmp.eq.s32.totalorder %s31, 1
      %p283 = por %p281, %p282
      %p285 = scmp.ne.s32.totalorder %s270, %s284
      %p286 = scmp.eq.s32.totalorder %s31, 0
      %p287 = por %p285, %p286
      %s289 = sadd.s32 %s288, 1
      %p292 = scmp.eq.s32.totalorder %s25, 1
      %p293 = scmp.ne.s32.totalorder %s288, %s290
      %p294 = scmp.eq.s32.totalorder %s25, 0
      %p295 = por %p293, %p294
      %p296 = scmp.ne.s32.totalorder %s288, %s290
      %p297 = scmp.eq.s32.totalorder %s30, 1
      %p298 = por %p296, %p297
      %p299 = scmp.ne.s32.totalorder %s290, %s291
      %p300 = scmp.eq.s32.totalorder %s30, 0
      %p301 = por %p299, %p300
      %p302 = scmp.ne.s32.totalorder %s290, %s291
      %p303 = scmp.eq.s32.totalorder %s31, 1
      %p304 = por %p302, %p303
      %p306 = scmp.ne.s32.totalorder %s291, %s305
      %p307 = scmp.eq.s32.totalorder %s31, 0
      %p308 = por %p306, %p307
      %s310 = sadd.s32 %s309, 1
      %p313 = scmp.eq.s32.totalorder %s25, 1
      %p314 = scmp.ne.s32.totalorder %s309, %s311
      %p315 = scmp.eq.s32.totalorder %s25, 0
      %p316 = por %p314, %p315
      %p317 = scmp.ne.s32.totalorder %s309, %s311
      %p318 = scmp.eq.s32.totalorder %s30, 1
      %p319 = por %p317, %p318
      %p320 = scmp.ne.s32.totalorder %s311, %s312
      %p321 = scmp.eq.s32.totalorder %s30, 0
      %p322 = por %p320, %p321
      %p323 = scmp.ne.s32.totalorder %s311, %s312
      %p324 = scmp.eq.s32.totalorder %s31, 1
      %p325 = por %p323, %p324
      %p327 = scmp.ne.s32.totalorder %s312, %s326
      %p328 = scmp.eq.s32.totalorder %s31, 0
      %p329 = por %p327, %p328
      %s331 = sadd.s32 %s330, 1
      %p334 = scmp.eq.s32.totalorder %s25, 1
      %p335 = scmp.ne.s32.totalorder %s330, %s332
      %p336 = scmp.eq.s32.totalorder %s25, 0
      %p337 = por %p335, %p336
      %p338 = scmp.ne.s32.totalorder %s330, %s332
      %p339 = scmp.eq.s32.totalorder %s30, 1
      %p340 = por %p338, %p339
      %p341 = scmp.ne.s32.totalorder %s332, %s333
      %p342 = scmp.eq.s32.totalorder %s30, 0
      %p343 = por %p341, %p342
      %p344 = scmp.ne.s32.totalorder %s332, %s333
      %p345 = scmp.eq.s32.totalorder %s31, 1
      %p346 = por %p344, %p345
      %p348 = scmp.ne.s32.totalorder %s333, %s347
      %p349 = scmp.eq.s32.totalorder %s31, 0
      %p350 = por %p348, %p349
      %s351 = ssub.s32 %s32, %s44
      %s352 = ssub.s32 %s33, %s40
      %s353 = sor.u32 %s351, %s352
      %p354 = scmp.eq.s32.totalorder %s353, 0
      %s356 = sadd.s32 %s355, 1
      %s357 = scalar_select %p354, %s355, %s356
      %p360 = pneg %p354
      %p361 = scmp.eq.s32.totalorder %s25, 1
      %p362 = por %p360, %p361
      %p363 = scmp.ne.s32.totalorder %s355, %s358
      %p364 = scmp.eq.s32.totalorder %s25, 0
      %p365 = por %p363, %p364
      %p366 = scmp.ne.s32.totalorder %s355, %s358
      %p367 = scmp.eq.s32.totalorder %s30, 1
      %p368 = por %p366, %p367
      %p369 = scmp.ne.s32.totalorder %s358, %s359
      %p370 = scmp.eq.s32.totalorder %s30, 0
      %p371 = por %p369, %p370
      %p372 = scmp.ne.s32.totalorder %s358, %s359
      %p373 = scmp.eq.s32.totalorder %s31, 1
      %p374 = por %p372, %p373
      %p376 = scmp.ne.s32.totalorder %s359, %s375
      %p377 = scmp.eq.s32.totalorder %s31, 0
      %p378 = por %p376, %p377
      %p379 = scmp.le.s32.totalorder 1, %s25
      %p380 = scmp.lt.s32.totalorder %s25, 3
      %p381 = pnand %p379, %p380
      %p382 = pneg %p381
      // Predicated region
      $region9: #{tpu_custom_call.1} parent=5 // pred_check
        _
      $region10: #{tpu_custom_call.1} parent=5 // pred_check_branch
        %384 = sbr.rel (%p381) target = $region12
      $region11: #{tpu_custom_call.1} parent=5 // pred_region
        %s385 = ssub.s32 %s25, 1
        // Predicated region
        $region13: #{tpu_custom_call.1} parent=11 // pred_check
          %p386 = pneg %p112
        $region14: #{tpu_custom_call.1} parent=11 // pred_check_branch
          %388 = sbr.rel (%p386) target = $region16
        $region15: #{tpu_custom_call.1} parent=11 // pred_region
          _
        $region16: #{tpu_custom_call.1} parent=11 // pred_fallthru
          _
        // Predicated region
        $region17: #{tpu_custom_call.1} parent=11 // pred_check
          %p389 = pneg %p133
        $region18: #{tpu_custom_call.1} parent=11 // pred_check_branch
          %391 = sbr.rel (%p389) target = $region20
        $region19: #{tpu_custom_call.1} parent=11 // pred_region
          _
        $region20: #{tpu_custom_call.1} parent=11 // pred_fallthru
          _
        // Predicated region
        $region21: #{tpu_custom_call.1} parent=11 // pred_check
          %p392 = pneg %p154
        $region22: #{tpu_custom_call.1} parent=11 // pred_check_branch
          %394 = sbr.rel (%p392) target = $region24
        $region23: #{tpu_custom_call.1} parent=11 // pred_region
          _
        $region24: #{tpu_custom_call.1} parent=11 // pred_fallthru
          _
        // Predicated region
        $region25: #{tpu_custom_call.1} parent=11 // pred_check
          %p395 = pneg %p175
        $region26: #{tpu_custom_call.1} parent=11 // pred_check_branch
          %397 = sbr.rel (%p395) target = $region28
        $region27: #{tpu_custom_call.1} parent=11 // pred_region
          _
        $region28: #{tpu_custom_call.1} parent=11 // pred_fallthru
          _
        // Predicated region
        $region29: #{tpu_custom_call.1} parent=11 // pred_check
          %p398 = pneg %p196
        $region30: #{tpu_custom_call.1} parent=11 // pred_check_branch
          %400 = sbr.rel (%p398) target = $region32
        $region31: #{tpu_custom_call.1} parent=11 // pred_region
          _
        $region32: #{tpu_custom_call.1} parent=11 // pred_fallthru
          _
        // Predicated region
        $region33: #{tpu_custom_call.1} parent=11 // pred_check
          %p401 = pneg %p217
        $region34: #{tpu_custom_call.1} parent=11 // pred_check_branch
          %403 = sbr.rel (%p401) target = $region36
        $region35: #{tpu_custom_call.1} parent=11 // pred_region
          _
        $region36: #{tpu_custom_call.1} parent=11 // pred_fallthru
          _
        // Predicated region
        $region37: #{tpu_custom_call.1} parent=11 // pred_check
          %p404 = pneg %p238
        $region38: #{tpu_custom_call.1} parent=11 // pred_check_branch
          %406 = sbr.rel (%p404) target = $region40
        $region39: #{tpu_custom_call.1} parent=11 // pred_region
          _
        $region40: #{tpu_custom_call.1} parent=11 // pred_fallthru
          _
        // Predicated region
        $region41: #{tpu_custom_call.1} parent=11 // pred_check
          %p407 = pneg %p259
        $region42: #{tpu_custom_call.1} parent=11 // pred_check_branch
          %409 = sbr.rel (%p407) target = $region44
        $region43: #{tpu_custom_call.1} parent=11 // pred_region
          %s411 = ssub.s32 16, 16
          %412 = vsyncadd [#allocation5], %s411
          %s414 = sshll.u32 [#allocation4], 4
          %s415 = int_to_ptr.vmem [resolvable:$true] %s414
          %417 = dma.hbm_to_vmem [thread:$0]  %s9, 16, %s415, [#allocation5]
        $region44: #{tpu_custom_call.1} parent=11 // pred_fallthru
          _
        // Predicated region
        $region45: #{tpu_custom_call.1} parent=11 // pred_check
          %p418 = pneg %p280
        $region46: #{tpu_custom_call.1} parent=11 // pred_check_branch
          %420 = sbr.rel (%p418) target = $region48
        $region47: #{tpu_custom_call.1} parent=11 // pred_region
          _
        $region48: #{tpu_custom_call.1} parent=11 // pred_fallthru
          _
        // Predicated region
        $region49: #{tpu_custom_call.1} parent=11 // pred_check
          %p421 = pneg %p301
        $region50: #{tpu_custom_call.1} parent=11 // pred_check_branch
          %423 = sbr.rel (%p421) target = $region52
        $region51: #{tpu_custom_call.1} parent=11 // pred_region
          %s425 = ssub.s32 16, 16
          %426 = vsyncadd [#allocation8], %s425
          %s428 = sshll.u32 [#allocation7], 4
          %s429 = int_to_ptr.vmem [resolvable:$true] %s428
          %431 = dma.hbm_to_vmem [thread:$0]  %s11, 16, %s429, [#allocation8]
        $region52: #{tpu_custom_call.1} parent=11 // pred_fallthru
          _
        // Predicated region
        $region53: #{tpu_custom_call.1} parent=11 // pred_check
          %p432 = pneg %p322
        $region54: #{tpu_custom_call.1} parent=11 // pred_check_branch
          %434 = sbr.rel (%p432) target = $region56
        $region55: #{tpu_custom_call.1} parent=11 // pred_region
          _
        $region56: #{tpu_custom_call.1} parent=11 // pred_fallthru
          _
        // Predicated region
        $region57: #{tpu_custom_call.1} parent=11 // pred_check
          %p435 = pneg %p343
        $region58: #{tpu_custom_call.1} parent=11 // pred_check_branch
          %437 = sbr.rel (%p435) target = $region60
        $region59: #{tpu_custom_call.1} parent=11 // pred_region
          _
        $region60: #{tpu_custom_call.1} parent=11 // pred_fallthru
          _
      $region12: #{tpu_custom_call.1} parent=5 // pred_fallthru
        _
      %p438 = scmp.lt.s32.totalorder %s25, 2
      // Predicated region
      $region61: #{tpu_custom_call.1} parent=5 // pred_check
        %p439 = pneg %p438
      $region62: #{tpu_custom_call.1} parent=5 // pred_check_branch
        %441 = sbr.rel (%p439) target = $region64
      $region63: #{tpu_custom_call.1} parent=5 // pred_region
        // Predicated region
        $region65: #{tpu_custom_call.1} parent=63 // pred_check
          %p442 = pneg %p59
        $region66: #{tpu_custom_call.1} parent=63 // pred_check_branch
          %444 = sbr.rel (%p442) target = $region68
        $region67: #{tpu_custom_call.1} parent=63 // pred_region
          %p445 = scmp.lt.s32.totalorder %s32, 1
          %s446 = scalar_select %p445, %s32, 1
          %p447 = scmp.lt.s32.totalorder %s33, 0
          %s448 = scalar_select %p447, %s33, 0
          %s449 = sadd.s32 %s448, %s446
          %s450 = smul.addr %s449, 8
          %s451 = scalar_lea.vmem %s0, %s450
        $region68: #{tpu_custom_call.1} parent=63 // pred_fallthru
          _
        // Predicated region
        $region69: #{tpu_custom_call.1} parent=63 // pred_check
          %p452 = pneg %p85
        $region70: #{tpu_custom_call.1} parent=63 // pred_check_branch
          %454 = sbr.rel (%p452) target = $region72
        $region71: #{tpu_custom_call.1} parent=63 // pred_region
          %p455 = scmp.lt.s32.totalorder %s32, 1
          %s456 = scalar_select %p455, %s32, 1
          %s457 = smul.addr %s456, 8
          %s458 = scalar_lea.vmem %s1, %s457
        $region72: #{tpu_custom_call.1} parent=63 // pred_fallthru
          _
      $region64: #{tpu_custom_call.1} parent=5 // pred_fallthru
        _
      %p459 = scmp.le.s32.totalorder 1, %s25
      %p460 = scmp.lt.s32.totalorder %s25, 3
      %p461 = pnand %p459, %p460
      %p462 = pneg %p461
      // Predicated region
      $region73: #{tpu_custom_call.1} parent=5 // pred_check
        _
      $region74: #{tpu_custom_call.1} parent=5 // pred_check_branch
        %464 = sbr.rel (%p461) target = $region76
      $region75: #{tpu_custom_call.1} parent=5 // pred_region
        %s465 = ssub.s32 %s25, 1
        // Predicated region
        $region77: #{tpu_custom_call.1} parent=75 // pred_check
          %p466 = pneg %p259
        $region78: #{tpu_custom_call.1} parent=75 // pred_check_branch
          %468 = sbr.rel (%p466) target = $region80
        $region79: #{tpu_custom_call.1} parent=75 // pred_region
          %469 = dma.done [#allocation5], 16
        $region80: #{tpu_custom_call.1} parent=75 // pred_fallthru
          _
        // Predicated region
        $region81: #{tpu_custom_call.1} parent=75 // pred_check
          %p470 = pneg %p301
        $region82: #{tpu_custom_call.1} parent=75 // pred_check_branch
          %472 = sbr.rel (%p470) target = $region84
        $region83: #{tpu_custom_call.1} parent=75 // pred_region
          %473 = dma.done [#allocation8], 16
        $region84: #{tpu_custom_call.1} parent=75 // pred_fallthru
          _
        %p474 = scmp.lt.s32.totalorder %s34, 1
        %s475 = scalar_select %p474, %s34, 1
        %p476 = scmp.lt.s32.totalorder %s35, 0
        %s477 = scalar_select %p476, %s35, 0
        %s478 = sadd.s32 %s477, %s475
        %s479 = smul.addr %s478, 8
        %s480 = scalar_lea.vmem %s0, %s479
        %p481 = pneg %p65
        %p482 = pneg %p62
        %p483 = scmp.lt.s32.totalorder %s34, 1
        %s484 = scalar_select %p483, %s34, 1
        %s485 = smul.addr %s484, 8
        %s486 = scalar_lea.vmem %s1, %s485
        %p487 = pneg %p91
        %p488 = pneg %p88
        %p489 = pneg %p112
        %p490 = pneg %p109
        %p491 = pneg %p133
        %p492 = pneg %p130
        %p493 = pneg %p154
        %p494 = pneg %p151
        %p495 = pneg %p175
        %p496 = pneg %p172
        %p497 = pneg %p196
        %p498 = pneg %p193
        %p499 = pneg %p217
        %p500 = pneg %p214
        %p501 = pneg %p238
        %p502 = pneg %p235
        %p503 = pneg %p259
        %p504 = pneg %p256
        %p505 = pneg %p280
        %p506 = pneg %p277
        %p507 = pneg %p301
        %p508 = pneg %p298
        %p509 = pneg %p322
        %p510 = pneg %p319
        %p511 = pneg %p343
        %p512 = pneg %p340
        %p513 = pneg %p371
        %p514 = pneg %p368
        %s515 = sand.u32 %s358, 1
        %s516 = scalar_lea.sflag [#allocation6], %s515
        %s517 = sand.u32 %s358, 1
        %s518 = smul.addr %s517, 8
        %s519 = scalar_lea.vmem [#allocation9], %s518
        %p520 = scmp.lt.s32.totalorder %s34, 1
        %s521 = scalar_select %p520, %s34, 1
        %p522 = scmp.lt.s32.totalorder %s35, 0
        %s523 = scalar_select %p522, %s35, 0
        %s524 = sadd.s32 %s523, %s521
        %s525 = smul.addr %s524, 8
        %s526 = scalar_lea.vmem %s0, %s525
        %p527 = scmp.lt.s32.totalorder %s34, 1
        %s528 = scalar_select %p527, %s34, 1
        %s529 = smul.addr %s528, 8
        %s530 = scalar_lea.vmem %s1, %s529
        %p532 = scmp.eq.s32.totalorder %s35, 0
        // Predicated region
        $region85: #{tpu_custom_call.1} parent=75 // pred_check
          %p533 = pneg %p532
        $region86: #{tpu_custom_call.1} parent=75 // pred_check_branch
          %535 = sbr.rel (%p533) target = $region88
        $region87: #{tpu_custom_call.1} parent=75 // pred_region
          %v536 = vld [vmem:[%s530] sm:$0xff]
          %v537 = vld [vmem:[%s2] sm:$0x1]
          %v538 = vld [vmem:[%s3] sm:$0x1]
          %vm539 = vcmask 261120
          %v540 = vsel %vm539, %v536, 0.0
          %541 = vadd.xlane.f32.xlu0 %v540
          %v542 = vpop.xlane.xlu0 %541
          %v543 = vrcp.pop 32.0
          %v544 = vmul.f32 %v542, %v543
          %v545 = vsub.f32 %v536, %v544
          %v546 = vmul.f32 %v545, %v545
          %v547 = vsel %vm539, %v546, 0.0
          %548 = vadd.xlane.f32.xlu0 %v547
          %v549 = vpop.xlane.xlu0 %548
          %v550 = vmul.f32 %v549, %v543
          %v551 = vadd.f32 %v550, 1e-05
          %v552 = vrsqrt.pop %v551
          %v553 = vmul.f32 %v545, %v552
          %v555 = vlaneseq
          %v556 = vshrl.u32 %v555, 7
          %v557 = vsub.s32 0, %v556
          %v558 = vrot.slane %v537, %v557
          %v560 = vmul.f32 %v553, %v558
          %v562 = vlaneseq
          %v563 = vshrl.u32 %v562, 7
          %v564 = vsub.s32 0, %v563
          %v565 = vrot.slane %v538, %v564
          %v567 = vadd.f32 %v560, %v565
          %v568 = vpack.c.bf16 %v567, %v567
          %v569 = vld [vmem:[%s4] sm:$0xf]
          %v570 = vld [vmem:[%s4 + $0x4] sm:$0xf]
          %v571 = vld [vmem:[%s4 + $0x8] sm:$0xf]
          %v572 = vld [vmem:[%s4 + $0xc] sm:$0xf]
          %v573 = vld [vmem:[%s5] sm:$0x1]
          %v575 = vlaneseq
          %v576 = vshrl.u32 %v575, 7
          %v577 = vsub.s32 0, %v576
          %v578 = vrot.slane %v573, %v577
          %v584 = vunpack.c.l.b16 %v569
          %v585 = vunpack.c.l.b16 %v570
          %v586 = vunpack.c.l.b16 %v571
          %v587 = vunpack.c.l.b16 %v572
          %v588 = vpack.c.b16 %v585, %v584
          %v589 = vpack.c.b16 %v587, %v586
          %v593 = vsel %vm539, %v568, 0
          %595 = vmatprep.subr.bf16.mxu0 0
          %596 = vmatpush1.bf16.msra.mxu0 0
          %597 = vmatprep.subr.bf16.mxu0 0
          %598 = vmatpush1.bf16.msra.mxu0 0
          %599 = vmatprep.subr.bf16.mxu0 0
          %600 = vmatpush1.bf16.msra.mxu0 0
          %601 = vmatprep.subr.bf16.mxu0 0
          %602 = vmatpush1.bf16.msra.mxu0 0
          %603 = vmatprep.subr.bf16.mxu0 0
          %604 = vmatpush1.bf16.msra.mxu0 0
          %605 = vmatprep.subr.bf16.mxu0 0
          %606 = vmatpush1.bf16.msra.mxu0 0
          %607 = vmatprep.subr.bf16.mxu0 0
          %608 = vmatpush1.bf16.msra.mxu0 %v589
          %609 = vmatprep.subr.bf16.mxu0 0
          %610 = vmatpush1.bf16.msra.mxu0 %v588
          %611 = vmatprep.subr.bf16.mxu0 0
          %612 = vmatpush2.bf16.msra.mxu0 0
          %613 = vmatprep.subr.bf16.mxu0 0
          %614 = vmatpush2.bf16.msra.mxu0 0
          %615 = vmatprep.subr.bf16.mxu0 0
          %616 = vmatpush2.bf16.msra.mxu0 0
          %617 = vmatprep.subr.bf16.mxu0 0
          %618 = vmatpush2.bf16.msra.mxu0 0
          %619 = vmatprep.subr.bf16.mxu0 0
          %620 = vmatpush2.bf16.msra.mxu0 0
          %621 = vmatprep.subr.bf16.mxu0 0
          %622 = vmatpush2.bf16.msra.mxu0 0
          %623 = vmatprep.subr.bf16.mxu0 0
          %624 = vmatpush2.bf16.msra.mxu0 0
          %625 = vmatprep.subr.bf16.mxu0 0
          %626 = vmatpush2.bf16.msra.mxu0 0
          %627 = vmatprep.mubr.bf16.mxu0 0
          %628 = vmatmul.mubr.bf16.gmra.mxu0 %v593
          %v629 = vpop.f32.mrf.mxu0
          %v630 = vadd.f32 %v578, %v629
          %v631 = vpop.f32.mrf.mxu0
          %v632 = vpop.f32.mrf.mxu0
          %v633 = vpop.f32.mrf.mxu0
          %634 = vdwg.mxu0
          %v635 = vmul.f32 %v630, 0.35355338
          %v636 = vpack.c.bf16 %v635, %v635
          %vm637 = vcmask 257024
          %638 = vst.msk [vmem:[#allocation2] sm:$0xf] %vm637, %v636
          %v639 = vpack.c.bf16 %v630, %v630
          %vm640 = vcmask 781568
          %641 = vst.msk [vmem:[#allocation2] sm:$0xf] %vm640, %v639
        $region88: #{tpu_custom_call.1} parent=75 // pred_fallthru
          _
        %v642 = vld [vmem:[%s526] sm:$0xff]
        %s643 = smul.u32 %s35, 8
        %v644 = vlaneseq
        %v645 = vshrl.u32 %v644, 7
        %v646 = vstv %s643
        %v647 = vadd.s32 %v645, %v646
        %v648 = vlaneseq
        %v649 = vand.u32 %v648, 127
        %vm650 = vcmp.ge.s32.totalorder %v647, %v649
        %s651 = sshra.s32 %s643, 3
        %s652 = sand.u32 %s643, 7
        %s653 = smul.addr %s651, 4
        %s654 = scalar_lea.vmem [#allocation2], %s653
        %v655 = vld [vmem:[%s654] sm:$0xf]
        %v656 = vld [vmem:[#allocation2] sm:$0xf]
        %v658 = vunpack.c.l.b16 %v656
        %v659 = vpack.c.b16 %v658, %v658
        %660 = vrot.lane.b32.xlu0 %v659, 96
        %v661 = vpop.permute.xlu0 %660
        %vm662 = vcmask 64512
        %v664 = vsel %vm662, %v655, 0
        %v667 = vsel %vm662, %v661, 0
        %669 = vmatprep.subr.bf16.mxu0 0
        %670 = vmatpush1.bf16.xpose.msra.mxu0 0
        %671 = vmatprep.subr.bf16.mxu0 0
        %672 = vmatpush1.bf16.xpose.msra.mxu0 0
        %673 = vmatprep.subr.bf16.mxu0 0
        %674 = vmatpush1.bf16.xpose.msra.mxu0 0
        %675 = vmatprep.subr.bf16.mxu0 0
        %676 = vmatpush1.bf16.xpose.msra.mxu0 0
        %677 = vmatprep.subr.bf16.mxu0 0
        %678 = vmatpush1.bf16.xpose.msra.mxu0 0
        %679 = vmatprep.subr.bf16.mxu0 0
        %680 = vmatpush1.bf16.xpose.msra.mxu0 0
        %681 = vmatprep.subr.bf16.mxu0 0
        %682 = vmatpush1.bf16.xpose.msra.mxu0 0
        %683 = vmatprep.subr.bf16.mxu0 0
        %684 = vmatpush1.bf16.xpose.msra.mxu0 %v667
        %685 = vmatprep.subr.bf16.mxu0 0
        %686 = vmatpush2.bf16.xpose.msra.mxu0 0
        %687 = vmatprep.subr.bf16.mxu0 0
        %688 = vmatpush2.bf16.xpose.msra.mxu0 0
        %689 = vmatprep.subr.bf16.mxu0 0
        %690 = vmatpush2.bf16.xpose.msra.mxu0 0
        %691 = vmatprep.subr.bf16.mxu0 0
        %692 = vmatpush2.bf16.xpose.msra.mxu0 0
        %693 = vmatprep.subr.bf16.mxu0 0
        %694 = vmatpush2.bf16.xpose.msra.mxu0 0
        %695 = vmatprep.subr.bf16.mxu0 0
        %696 = vmatpush2.bf16.xpose.msra.mxu0 0
        %697 = vmatprep.subr.bf16.mxu0 0
        %698 = vmatpush2.bf16.xpose.msra.mxu0 0
        %699 = vmatprep.subr.bf16.mxu0 0
        %700 = vmatpush2.bf16.xpose.msra.mxu0 0
        %701 = vmatprep.mubr.bf16.mxu0 0
        %702 = vmatmul.mubr.bf16.gmra.mxu0 %v664
        %v703 = vpop.f32.mrf.mxu0
        %v704 = vadd.f32 0.0, %v703
        %v705 = vpop.f32.mrf.mxu0
        %v706 = vpop.f32.mrf.mxu0
        %v707 = vpop.f32.mrf.mxu0
        %708 = vdwg.mxu0
        %v709 = vsel %vm650, %v704, -inf
        %v710 = vsel %vm662, %v709, -inf
        %711 = vmax.xlane.f32.xlu0 %v710
        %v712 = vpop.xlane.xlu0 %711
        %v713 = vsub.f32 %v709, %v712
        %v714 = vmul.f32 %v713, 1.442695
        %v715 = vpow.pop %v714
        %v716 = vsel %vm662, %v715, 0.0
        %717 = vadd.xlane.f32.xlu0 %v716
        %v718 = vpop.xlane.xlu0 %717
        %v719 = vrcp.pop %v718
        %v720 = vmul.f32 %v715, %v719
        %v721 = vpack.c.bf16 %v720, %v720
        %722 = vrot.lane.b32.xlu0 %v659, 64
        %v723 = vpop.permute.xlu0 %722
        %v725 = vsel %vm662, %v721, 0
        %vm727 = vcmask 1043456
        %v729 = vsel %vm727, %v723, 0
        %731 = vmatprep.subr.bf16.mxu0 0
        %732 = vmatpush1.bf16.msra.mxu0 0
        %733 = vmatprep.subr.bf16.mxu0 0
        %734 = vmatpush1.bf16.msra.mxu0 0
        %735 = vmatprep.subr.bf16.mxu0 0
        %736 = vmatpush1.bf16.msra.mxu0 0
        %737 = vmatprep.subr.bf16.mxu0 0
        %738 = vmatpush1.bf16.msra.mxu0 0
        %739 = vmatprep.subr.bf16.mxu0 0
        %740 = vmatpush1.bf16.msra.mxu0 0
        %741 = vmatprep.subr.bf16.mxu0 0
        %742 = vmatpush1.bf16.msra.mxu0 0
        %743 = vmatprep.subr.bf16.mxu0 0
        %744 = vmatpush1.bf16.msra.mxu0 0
        %745 = vmatprep.subr.bf16.mxu0 0
        %746 = vmatpush1.bf16.msra.mxu0 %v729
        %747 = vmatprep.subr.bf16.mxu0 0
        %748 = vmatpush2.bf16.msra.mxu0 0
        %749 = vmatprep.subr.bf16.mxu0 0
        %750 = vmatpush2.bf16.msra.mxu0 0
        %751 = vmatprep.subr.bf16.mxu0 0
        %752 = vmatpush2.bf16.msra.mxu0 0
        %753 = vmatprep.subr.bf16.mxu0 0
        %754 = vmatpush2.bf16.msra.mxu0 0
        %755 = vmatprep.subr.bf16.mxu0 0
        %756 = vmatpush2.bf16.msra.mxu0 0
        %757 = vmatprep.subr.bf16.mxu0 0
        %758 = vmatpush2.bf16.msra.mxu0 0
        %759 = vmatprep.subr.bf16.mxu0 0
        %760 = vmatpush2.bf16.msra.mxu0 0
        %761 = vmatprep.subr.bf16.mxu0 0
        %762 = vmatpush2.bf16.msra.mxu0 0
        %763 = vmatprep.mubr.bf16.mxu0 0
        %764 = vmatmul.mubr.bf16.gmra.mxu0 %v725
        %v765 = vpop.f32.mrf.mxu0
        %v766 = vadd.f32 0.0, %v765
        %v767 = vpop.f32.mrf.mxu0
        %v768 = vpop.f32.mrf.mxu0
        %v769 = vpop.f32.mrf.mxu0
        %770 = vdwg.mxu0
        %771 = vst.msk [vmem:[#allocation3] sm:$0xff] %vm662, %v766
        %v772 = vld [vmem:[%s654] sm:$0xf]
        %v773 = vld [vmem:[#allocation2] sm:$0xf]
        %v775 = vunpack.c.l.b16 %v772
        %v776 = vpack.c.b16 %v775, %v775
        %777 = vrot.lane.b32.xlu0 %v776, 120
        %v778 = vpop.permute.xlu0 %777
        %v780 = vunpack.c.l.b16 %v773
        %v781 = vpack.c.b16 %v780, %v780
        %782 = vrot.lane.b32.xlu0 %v781, 88
        %v783 = vpop.permute.xlu0 %782
        %v785 = vsel %vm662, %v778, 0
        %v788 = vsel %vm662, %v783, 0
        %790 = vmatprep.subr.bf16.mxu0 0
        %791 = vmatpush1.bf16.xpose.msra.mxu0 0
        %792 = vmatprep.subr.bf16.mxu0 0
        %793 = vmatpush1.bf16.xpose.msra.mxu0 0
        %794 = vmatprep.subr.bf16.mxu0 0
        %795 = vmatpush1.bf16.xpose.msra.mxu0 0
        %796 = vmatprep.subr.bf16.mxu0 0
        %797 = vmatpush1.bf16.xpose.msra.mxu0 0
        %798 = vmatprep.subr.bf16.mxu0 0
        %799 = vmatpush1.bf16.xpose.msra.mxu0 0
        %800 = vmatprep.subr.bf16.mxu0 0
        %801 = vmatpush1.bf16.xpose.msra.mxu0 0
        %802 = vmatprep.subr.bf16.mxu0 0
        %803 = vmatpush1.bf16.xpose.msra.mxu0 0
        %804 = vmatprep.subr.bf16.mxu0 0
        %805 = vmatpush1.bf16.xpose.msra.mxu0 %v788
        %806 = vmatprep.subr.bf16.mxu0 0
        %807 = vmatpush2.bf16.xpose.msra.mxu0 0
        %808 = vmatprep.subr.bf16.mxu0 0
        %809 = vmatpush2.bf16.xpose.msra.mxu0 0
        %810 = vmatprep.subr.bf16.mxu0 0
        %811 = vmatpush2.bf16.xpose.msra.mxu0 0
        %812 = vmatprep.subr.bf16.mxu0 0
        %813 = vmatpush2.bf16.xpose.msra.mxu0 0
        %814 = vmatprep.subr.bf16.mxu0 0
        %815 = vmatpush2.bf16.xpose.msra.mxu0 0
        %816 = vmatprep.subr.bf16.mxu0 0
        %817 = vmatpush2.bf16.xpose.msra.mxu0 0
        %818 = vmatprep.subr.bf16.mxu0 0
        %819 = vmatpush2.bf16.xpose.msra.mxu0 0
        %820 = vmatprep.subr.bf16.mxu0 0
        %821 = vmatpush2.bf16.xpose.msra.mxu0 0
        %822 = vmatprep.mubr.bf16.mxu0 0
        %823 = vmatmul.mubr.bf16.gmra.mxu0 %v785
        %v824 = vpop.f32.mrf.mxu0
        %v825 = vadd.f32 0.0, %v824
        %v826 = vpop.f32.mrf.mxu0
        %v827 = vpop.f32.mrf.mxu0
        %v828 = vpop.f32.mrf.mxu0
        %829 = vdwg.mxu0
        %v830 = vsel %vm650, %v825, -inf
        %v831 = vsel %vm662, %v830, -inf
        %832 = vmax.xlane.f32.xlu0 %v831
        %v833 = vpop.xlane.xlu0 %832
        %v834 = vsub.f32 %v830, %v833
        %v835 = vmul.f32 %v834, 1.442695
        %v836 = vpow.pop %v835
        %v837 = vsel %vm662, %v836, 0.0
        %838 = vadd.xlane.f32.xlu0 %v837
        %v839 = vpop.xlane.xlu0 %838
        %v840 = vrcp.pop %v839
        %v841 = vmul.f32 %v836, %v840
        %v842 = vpack.c.bf16 %v841, %v841
        %843 = vrot.lane.b32.xlu0 %v781, 56
        %v844 = vpop.permute.xlu0 %843
        %v846 = vsel %vm662, %v842, 0
        %v849 = vsel %vm727, %v844, 0
        %851 = vmatprep.subr.bf16.mxu0 0
        %852 = vmatpush1.bf16.msra.mxu0 0
        %853 = vmatprep.subr.bf16.mxu0 0
        %854 = vmatpush1.bf16.msra.mxu0 0
        %855 = vmatprep.subr.bf16.mxu0 0
        %856 = vmatpush1.bf16.msra.mxu0 0
        %857 = vmatprep.subr.bf16.mxu0 0
        %858 = vmatpush1.bf16.msra.mxu0 0
        %859 = vmatprep.subr.bf16.mxu0 0
        %860 = vmatpush1.bf16.msra.mxu0 0
        %861 = vmatprep.subr.bf16.mxu0 0
        %862 = vmatpush1.bf16.msra.mxu0 0
        %863 = vmatprep.subr.bf16.mxu0 0
        %864 = vmatpush1.bf16.msra.mxu0 0
        %865 = vmatprep.subr.bf16.mxu0 0
        %866 = vmatpush1.bf16.msra.mxu0 %v849
        %867 = vmatprep.subr.bf16.mxu0 0
        %868 = vmatpush2.bf16.msra.mxu0 0
        %869 = vmatprep.subr.bf16.mxu0 0
        %870 = vmatpush2.bf16.msra.mxu0 0
        %871 = vmatprep.subr.bf16.mxu0 0
        %872 = vmatpush2.bf16.msra.mxu0 0
        %873 = vmatprep.subr.bf16.mxu0 0
        %874 = vmatpush2.bf16.msra.mxu0 0
        %875 = vmatprep.subr.bf16.mxu0 0
        %876 = vmatpush2.bf16.msra.mxu0 0
        %877 = vmatprep.subr.bf16.mxu0 0
        %878 = vmatpush2.bf16.msra.mxu0 0
        %879 = vmatprep.subr.bf16.mxu0 0
        %880 = vmatpush2.bf16.msra.mxu0 0
        %881 = vmatprep.subr.bf16.mxu0 0
        %882 = vmatpush2.bf16.msra.mxu0 0
        %883 = vmatprep.mubr.bf16.mxu0 0
        %884 = vmatmul.mubr.bf16.gmra.mxu0 %v846
        %v885 = vpop.f32.mrf.mxu0
        %v886 = vadd.f32 0.0, %v885
        %v887 = vpop.f32.mrf.mxu0
        %v888 = vpop.f32.mrf.mxu0
        %v889 = vpop.f32.mrf.mxu0
        %890 = vdwg.mxu0
        %892 = vrot.lane.b32.xlu0 %v886, 8
        %v893 = vpop.permute.xlu0 %892
        %vm895 = vcmask 130112
        %896 = vst.msk [vmem:[#allocation3] sm:$0xff] %vm895, %v893
        %v897 = vld [vmem:[%s654] sm:$0xf]
        %v898 = vld [vmem:[#allocation2] sm:$0xf]
        %v900 = vunpack.c.l.b16 %v897
        %v901 = vpack.c.b16 %v900, %v900
        %902 = vrot.lane.b32.xlu0 %v901, 112
        %v903 = vpop.permute.xlu0 %902
        %v905 = vunpack.c.l.b16 %v898
        %v906 = vpack.c.b16 %v905, %v905
        %907 = vrot.lane.b32.xlu0 %v906, 80
        %v908 = vpop.permute.xlu0 %907
        %v910 = vsel %vm662, %v903, 0
        %v913 = vsel %vm662, %v908, 0
        %915 = vmatprep.subr.bf16.mxu0 0
        %916 = vmatpush1.bf16.xpose.msra.mxu0 0
        %917 = vmatprep.subr.bf16.mxu0 0
        %918 = vmatpush1.bf16.xpose.msra.mxu0 0
        %919 = vmatprep.subr.bf16.mxu0 0
        %920 = vmatpush1.bf16.xpose.msra.mxu0 0
        %921 = vmatprep.subr.bf16.mxu0 0
        %922 = vmatpush1.bf16.xpose.msra.mxu0 0
        %923 = vmatprep.subr.bf16.mxu0 0
        %924 = vmatpush1.bf16.xpose.msra.mxu0 0
        %925 = vmatprep.subr.bf16.mxu0 0
        %926 = vmatpush1.bf16.xpose.msra.mxu0 0
        %927 = vmatprep.subr.bf16.mxu0 0
        %928 = vmatpush1.bf16.xpose.msra.mxu0 0
        %929 = vmatprep.subr.bf16.mxu0 0
        %930 = vmatpush1.bf16.xpose.msra.mxu0 %v913
        %931 = vmatprep.subr.bf16.mxu0 0
        %932 = vmatpush2.bf16.xpose.msra.mxu0 0
        %933 = vmatprep.subr.bf16.mxu0 0
        %934 = vmatpush2.bf16.xpose.msra.mxu0 0
        %935 = vmatprep.subr.bf16.mxu0 0
        %936 = vmatpush2.bf16.xpose.msra.mxu0 0
        %937 = vmatprep.subr.bf16.mxu0 0
        %938 = vmatpush2.bf16.xpose.msra.mxu0 0
        %939 = vmatprep.subr.bf16.mxu0 0
        %940 = vmatpush2.bf16.xpose.msra.mxu0 0
        %941 = vmatprep.subr.bf16.mxu0 0
        %942 = vmatpush2.bf16.xpose.msra.mxu0 0
        %943 = vmatprep.subr.bf16.mxu0 0
        %944 = vmatpush2.bf16.xpose.msra.mxu0 0
        %945 = vmatprep.subr.bf16.mxu0 0
        %946 = vmatpush2.bf16.xpose.msra.mxu0 0
        %947 = vmatprep.mubr.bf16.mxu0 0
        %948 = vmatmul.mubr.bf16.gmra.mxu0 %v910
        %v949 = vpop.f32.mrf.mxu0
        %v950 = vadd.f32 0.0, %v949
        %v951 = vpop.f32.mrf.mxu0
        %v952 = vpop.f32.mrf.mxu0
        %v953 = vpop.f32.mrf.mxu0
        %954 = vdwg.mxu0
        %v955 = vsel %vm650, %v950, -inf
        %v956 = vsel %vm662, %v955, -inf
        %957 = vmax.xlane.f32.xlu0 %v956
        %v958 = vpop.xlane.xlu0 %957
        %v959 = vsub.f32 %v955, %v958
        %v960 = vmul.f32 %v959, 1.442695
        %v961 = vpow.pop %v960
        %v962 = vsel %vm662, %v961, 0.0
        %963 = vadd.xlane.f32.xlu0 %v962
        %v964 = vpop.xlane.xlu0 %963
        %v965 = vrcp.pop %v964
        %v966 = vmul.f32 %v961, %v965
        %v967 = vpack.c.bf16 %v966, %v966
        %968 = vrot.lane.b32.xlu0 %v906, 48
        %v969 = vpop.permute.xlu0 %968
        %v971 = vsel %vm662, %v967, 0
        %v974 = vsel %vm727, %v969, 0
        %976 = vmatprep.subr.bf16.mxu0 0
        %977 = vmatpush1.bf16.msra.mxu0 0
        %978 = vmatprep.subr.bf16.mxu0 0
        %979 = vmatpush1.bf16.msra.mxu0 0
        %980 = vmatprep.subr.bf16.mxu0 0
        %981 = vmatpush1.bf16.msra.mxu0 0
        %982 = vmatprep.subr.bf16.mxu0 0
        %983 = vmatpush1.bf16.msra.mxu0 0
        %984 = vmatprep.subr.bf16.mxu0 0
        %985 = vmatpush1.bf16.msra.mxu0 0
        %986 = vmatprep.subr.bf16.mxu0 0
        %987 = vmatpush1.bf16.msra.mxu0 0
        %988 = vmatprep.subr.bf16.mxu0 0
        %989 = vmatpush1.bf16.msra.mxu0 0
        %990 = vmatprep.subr.bf16.mxu0 0
        %991 = vmatpush1.bf16.msra.mxu0 %v974
        %992 = vmatprep.subr.bf16.mxu0 0
        %993 = vmatpush2.bf16.msra.mxu0 0
        %994 = vmatprep.subr.bf16.mxu0 0
        %995 = vmatpush2.bf16.msra.mxu0 0
        %996 = vmatprep.subr.bf16.mxu0 0
        %997 = vmatpush2.bf16.msra.mxu0 0
        %998 = vmatprep.subr.bf16.mxu0 0
        %999 = vmatpush2.bf16.msra.mxu0 0
        %1000 = vmatprep.subr.bf16.mxu0 0
        %1001 = vmatpush2.bf16.msra.mxu0 0
        %1002 = vmatprep.subr.bf16.mxu0 0
        %1003 = vmatpush2.bf16.msra.mxu0 0
        %1004 = vmatprep.subr.bf16.mxu0 0
        %1005 = vmatpush2.bf16.msra.mxu0 0
        %1006 = vmatprep.subr.bf16.mxu0 0
        %1007 = vmatpush2.bf16.msra.mxu0 0
        %1008 = vmatprep.mubr.bf16.mxu0 0
        %1009 = vmatmul.mubr.bf16.gmra.mxu0 %v971
        %v1010 = vpop.f32.mrf.mxu0
        %v1011 = vadd.f32 0.0, %v1010
        %v1012 = vpop.f32.mrf.mxu0
        %v1013 = vpop.f32.mrf.mxu0
        %v1014 = vpop.f32.mrf.mxu0
        %1015 = vdwg.mxu0
        %1017 = vrot.lane.b32.xlu0 %v1011, 16
        %v1018 = vpop.permute.xlu0 %1017
        %vm1020 = vcmask 195712
        %1021 = vst.msk [vmem:[#allocation3] sm:$0xff] %vm1020, %v1018
        %v1022 = vld [vmem:[%s654] sm:$0xf]
        %v1023 = vld [vmem:[#allocation2] sm:$0xf]
        %v1025 = vunpack.c.l.b16 %v1022
        %v1026 = vpack.c.b16 %v1025, %v1025
        %1027 = vrot.lane.b32.xlu0 %v1026, 104
        %v1028 = vpop.permute.xlu0 %1027
        %v1030 = vunpack.c.l.b16 %v1023
        %v1031 = vpack.c.b16 %v1030, %v1030
        %1032 = vrot.lane.b32.xlu0 %v1031, 72
        %v1033 = vpop.permute.xlu0 %1032
        %v1035 = vsel %vm662, %v1028, 0
        %v1038 = vsel %vm662, %v1033, 0
        %1040 = vmatprep.subr.bf16.mxu0 0
        %1041 = vmatpush1.bf16.xpose.msra.mxu0 0
        %1042 = vmatprep.subr.bf16.mxu0 0
        %1043 = vmatpush1.bf16.xpose.msra.mxu0 0
        %1044 = vmatprep.subr.bf16.mxu0 0
        %1045 = vmatpush1.bf16.xpose.msra.mxu0 0
        %1046 = vmatprep.subr.bf16.mxu0 0
        %1047 = vmatpush1.bf16.xpose.msra.mxu0 0
        %1048 = vmatprep.subr.bf16.mxu0 0
        %1049 = vmatpush1.bf16.xpose.msra.mxu0 0
        %1050 = vmatprep.subr.bf16.mxu0 0
        %1051 = vmatpush1.bf16.xpose.msra.mxu0 0
        %1052 = vmatprep.subr.bf16.mxu0 0
        %1053 = vmatpush1.bf16.xpose.msra.mxu0 0
        %1054 = vmatprep.subr.bf16.mxu0 0
        %1055 = vmatpush1.bf16.xpose.msra.mxu0 %v1038
        %1056 = vmatprep.subr.bf16.mxu0 0
        %1057 = vmatpush2.bf16.xpose.msra.mxu0 0
        %1058 = vmatprep.subr.bf16.mxu0 0
        %1059 = vmatpush2.bf16.xpose.msra.mxu0 0
        %1060 = vmatprep.subr.bf16.mxu0 0
        %1061 = vmatpush2.bf16.xpose.msra.mxu0 0
        %1062 = vmatprep.subr.bf16.mxu0 0
        %1063 = vmatpush2.bf16.xpose.msra.mxu0 0
        %1064 = vmatprep.subr.bf16.mxu0 0
        %1065 = vmatpush2.bf16.xpose.msra.mxu0 0
        %1066 = vmatprep.subr.bf16.mxu0 0
        %1067 = vmatpush2.bf16.xpose.msra.mxu0 0
        %1068 = vmatprep.subr.bf16.mxu0 0
        %1069 = vmatpush2.bf16.xpose.msra.mxu0 0
        %1070 = vmatprep.subr.bf16.mxu0 0
        %1071 = vmatpush2.bf16.xpose.msra.mxu0 0
        %1072 = vmatprep.mubr.bf16.mxu0 0
        %1073 = vmatmul.mubr.bf16.gmra.mxu0 %v1035
        %v1074 = vpop.f32.mrf.mxu0
        %v1075 = vadd.f32 0.0, %v1074
        %v1076 = vpop.f32.mrf.mxu0
        %v1077 = vpop.f32.mrf.mxu0
        %v1078 = vpop.f32.mrf.mxu0
        %1079 = vdwg.mxu0
        %v1080 = vsel %vm650, %v1075, -inf
        %v1081 = vsel %vm662, %v1080, -inf
        %1082 = vmax.xlane.f32.xlu0 %v1081
        %v1083 = vpop.xlane.xlu0 %1082
        %v1084 = vsub.f32 %v1080, %v1083
        %v1085 = vmul.f32 %v1084, 1.442695
        %v1086 = vpow.pop %v1085
        %v1087 = vsel %vm662, %v1086, 0.0
        %1088 = vadd.xlane.f32.xlu0 %v1087
        %v1089 = vpop.xlane.xlu0 %1088
        %v1090 = vrcp.pop %v1089
        %v1091 = vmul.f32 %v1086, %v1090
        %v1092 = vpack.c.bf16 %v1091, %v1091
        %1093 = vrot.lane.b32.xlu0 %v1031, 40
        %v1094 = vpop.permute.xlu0 %1093
        %v1096 = vsel %vm662, %v1092, 0
        %v1099 = vsel %vm727, %v1094, 0
        %1101 = vmatprep.subr.bf16.mxu0 0
        %1102 = vmatpush1.bf16.msra.mxu0 0
        %1103 = vmatprep.subr.bf16.mxu0 0
        %1104 = vmatpush1.bf16.msra.mxu0 0
        %1105 = vmatprep.subr.bf16.mxu0 0
        %1106 = vmatpush1.bf16.msra.mxu0 0
        %1107 = vmatprep.subr.bf16.mxu0 0
        %1108 = vmatpush1.bf16.msra.mxu0 0
        %1109 = vmatprep.subr.bf16.mxu0 0
        %1110 = vmatpush1.bf16.msra.mxu0 0
        %1111 = vmatprep.subr.bf16.mxu0 0
        %1112 = vmatpush1.bf16.msra.mxu0 0
        %1113 = vmatprep.subr.bf16.mxu0 0
        %1114 = vmatpush1.bf16.msra.mxu0 0
        %1115 = vmatprep.subr.bf16.mxu0 0
        %1116 = vmatpush1.bf16.msra.mxu0 %v1099
        %1117 = vmatprep.subr.bf16.mxu0 0
        %1118 = vmatpush2.bf16.msra.mxu0 0
        %1119 = vmatprep.subr.bf16.mxu0 0
        %1120 = vmatpush2.bf16.msra.mxu0 0
        %1121 = vmatprep.subr.bf16.mxu0 0
        %1122 = vmatpush2.bf16.msra.mxu0 0
        %1123 = vmatprep.subr.bf16.mxu0 0
        %1124 = vmatpush2.bf16.msra.mxu0 0
        %1125 = vmatprep.subr.bf16.mxu0 0
        %1126 = vmatpush2.bf16.msra.mxu0 0
        %1127 = vmatprep.subr.bf16.mxu0 0
        %1128 = vmatpush2.bf16.msra.mxu0 0
        %1129 = vmatprep.subr.bf16.mxu0 0
        %1130 = vmatpush2.bf16.msra.mxu0 0
        %1131 = vmatprep.subr.bf16.mxu0 0
        %1132 = vmatpush2.bf16.msra.mxu0 0
        %1133 = vmatprep.mubr.bf16.mxu0 0
        %1134 = vmatmul.mubr.bf16.gmra.mxu0 %v1096
        %v1135 = vpop.f32.mrf.mxu0
        %v1136 = vadd.f32 0.0, %v1135
        %v1137 = vpop.f32.mrf.mxu0
        %v1138 = vpop.f32.mrf.mxu0
        %v1139 = vpop.f32.mrf.mxu0
        %1140 = vdwg.mxu0
        %1142 = vrot.lane.b32.xlu0 %v1136, 24
        %v1143 = vpop.permute.xlu0 %1142
        %vm1145 = vcmask 261312
        %1146 = vst.msk [vmem:[#allocation3] sm:$0xff] %vm1145, %v1143
        %v1147 = vld [vmem:[#allocation3] sm:$0xff]
        %v1148 = vpack.c.bf16 %v1147, %v1147
        %v1149 = vld [vmem:[%s6] sm:$0xf]
        %v1150 = vld [vmem:[%s6 + $0x4] sm:$0xf]
        %v1151 = vld [vmem:[%s6 + $0x8] sm:$0xf]
        %v1152 = vld [vmem:[%s6 + $0xc] sm:$0xf]
        %v1153 = vld [vmem:[%s7] sm:$0x1]
        %v1155 = vlaneseq
        %v1156 = vshrl.u32 %v1155, 7
        %v1157 = vsub.s32 0, %v1156
        %v1158 = vrot.slane %v1153, %v1157
        %v1164 = vunpack.c.l.b16 %v1149
        %v1165 = vunpack.c.l.b16 %v1150
        %v1166 = vunpack.c.l.b16 %v1151
        %v1167 = vunpack.c.l.b16 %v1152
        %v1168 = vpack.c.b16 %v1165, %v1164
        %v1169 = vpack.c.b16 %v1167, %v1166
        %vm1172 = vcmask 261120
        %v1174 = vsel %vm1172, %v1148, 0
        %1176 = vmatprep.subr.bf16.mxu0 0
        %1177 = vmatpush1.bf16.msra.mxu0 0
        %1178 = vmatprep.subr.bf16.mxu0 0
        %1179 = vmatpush1.bf16.msra.mxu0 0
        %1180 = vmatprep.subr.bf16.mxu0 0
        %1181 = vmatpush1.bf16.msra.mxu0 0
        %1182 = vmatprep.subr.bf16.mxu0 0
        %1183 = vmatpush1.bf16.msra.mxu0 0
        %1184 = vmatprep.subr.bf16.mxu0 0
        %1185 = vmatpush1.bf16.msra.mxu0 0
        %1186 = vmatprep.subr.bf16.mxu0 0
        %1187 = vmatpush1.bf16.msra.mxu0 0
        %1188 = vmatprep.subr.bf16.mxu0 0
        %1189 = vmatpush1.bf16.msra.mxu0 %v1169
        %1190 = vmatprep.subr.bf16.mxu0 0
        %1191 = vmatpush1.bf16.msra.mxu0 %v1168
        %1192 = vmatprep.subr.bf16.mxu0 0
        %1193 = vmatpush2.bf16.msra.mxu0 0
        %1194 = vmatprep.subr.bf16.mxu0 0
        %1195 = vmatpush2.bf16.msra.mxu0 0
        %1196 = vmatprep.subr.bf16.mxu0 0
        %1197 = vmatpush2.bf16.msra.mxu0 0
        %1198 = vmatprep.subr.bf16.mxu0 0
        %1199 = vmatpush2.bf16.msra.mxu0 0
        %1200 = vmatprep.subr.bf16.mxu0 0
        %1201 = vmatpush2.bf16.msra.mxu0 0
        %1202 = vmatprep.subr.bf16.mxu0 0
        %1203 = vmatpush2.bf16.msra.mxu0 0
        %1204 = vmatprep.subr.bf16.mxu0 0
        %1205 = vmatpush2.bf16.msra.mxu0 0
        %1206 = vmatprep.subr.bf16.mxu0 0
        %1207 = vmatpush2.bf16.msra.mxu0 0
        %1208 = vmatprep.mubr.bf16.mxu0 0
        %1209 = vmatmul.mubr.bf16.gmra.mxu0 %v1174
        %v1210 = vpop.f32.mrf.mxu0
        %v1211 = vadd.f32 %v1158, %v1210
        %v1212 = vpop.f32.mrf.mxu0
        %v1213 = vpop.f32.mrf.mxu0
        %v1214 = vpop.f32.mrf.mxu0
        %1215 = vdwg.mxu0
        %v1216 = vadd.f32 %v642, %v1211
        %v1217 = vld [vmem:[%s8] sm:$0x1]
        %v1218 = vld [vmem:[#allocation4] sm:$0x1]
        %v1219 = vsel %vm1172, %v1216, 0.0
        %1220 = vadd.xlane.f32.xlu0 %v1219
        %v1221 = vpop.xlane.xlu0 %1220
        %v1222 = vrcp.pop 32.0
        %v1223 = vmul.f32 %v1221, %v1222
        %v1224 = vsub.f32 %v1216, %v1223
        %v1225 = vmul.f32 %v1224, %v1224
        %v1226 = vsel %vm1172, %v1225, 0.0
        %1227 = vadd.xlane.f32.xlu0 %v1226
        %v1228 = vpop.xlane.xlu0 %1227
        %v1229 = vmul.f32 %v1228, %v1222
        %v1230 = vadd.f32 %v1229, 1e-05
        %v1231 = vrsqrt.pop %v1230
        %v1232 = vmul.f32 %v1224, %v1231
        %v1234 = vlaneseq
        %v1235 = vshrl.u32 %v1234, 7
        %v1236 = vsub.s32 0, %v1235
        %v1237 = vrot.slane %v1217, %v1236
        %v1239 = vmul.f32 %v1232, %v1237
        %v1241 = vlaneseq
        %v1242 = vshrl.u32 %v1241, 7
        %v1243 = vsub.s32 0, %v1242
        %v1244 = vrot.slane %v1218, %v1243
        %v1246 = vadd.f32 %v1239, %v1244
        %v1247 = vpack.c.bf16 %v1246, %v1246
        %v1248 = vld [vmem:[%s10] sm:$0xf]
        %v1249 = vld [vmem:[%s10 + $0x4] sm:$0xf]
        %v1250 = vld [vmem:[%s10 + $0x8] sm:$0xf]
        %v1251 = vld [vmem:[%s10 + $0xc] sm:$0xf]
        %v1252 = vld [vmem:[#allocation7] sm:$0x1]
        %v1254 = vlaneseq
        %v1255 = vshrl.u32 %v1254, 7
        %v1256 = vsub.s32 0, %v1255
        %v1257 = vrot.slane %v1252, %v1256
        %v1263 = vunpack.c.l.b16 %v1248
        %v1264 = vunpack.c.l.b16 %v1249
        %v1265 = vunpack.c.l.b16 %v1250
        %v1266 = vunpack.c.l.b16 %v1251
        %v1267 = vpack.c.b16 %v1264, %v1263
        %v1268 = vpack.c.b16 %v1266, %v1265
        %v1272 = vsel %vm1172, %v1247, 0
        %1274 = vmatprep.subr.bf16.mxu0 0
        %1275 = vmatpush1.bf16.msra.mxu0 0
        %1276 = vmatprep.subr.bf16.mxu0 0
        %1277 = vmatpush1.bf16.msra.mxu0 0
        %1278 = vmatprep.subr.bf16.mxu0 0
        %1279 = vmatpush1.bf16.msra.mxu0 0
        %1280 = vmatprep.subr.bf16.mxu0 0
        %1281 = vmatpush1.bf16.msra.mxu0 0
        %1282 = vmatprep.subr.bf16.mxu0 0
        %1283 = vmatpush1.bf16.msra.mxu0 0
        %1284 = vmatprep.subr.bf16.mxu0 0
        %1285 = vmatpush1.bf16.msra.mxu0 0
        %1286 = vmatprep.subr.bf16.mxu0 0
        %1287 = vmatpush1.bf16.msra.mxu0 %v1268
        %1288 = vmatprep.subr.bf16.mxu0 0
        %1289 = vmatpush1.bf16.msra.mxu0 %v1267
        %1290 = vmatprep.subr.bf16.mxu0 0
        %1291 = vmatpush2.bf16.msra.mxu0 0
        %1292 = vmatprep.subr.bf16.mxu0 0
        %1293 = vmatpush2.bf16.msra.mxu0 0
        %1294 = vmatprep.subr.bf16.mxu0 0
        %1295 = vmatpush2.bf16.msra.mxu0 0
        %1296 = vmatprep.subr.bf16.mxu0 0
        %1297 = vmatpush2.bf16.msra.mxu0 0
        %1298 = vmatprep.subr.bf16.mxu0 0
        %1299 = vmatpush2.bf16.msra.mxu0 0
        %1300 = vmatprep.subr.bf16.mxu0 0
        %1301 = vmatpush2.bf16.msra.mxu0 0
        %1302 = vmatprep.subr.bf16.mxu0 0
        %1303 = vmatpush2.bf16.msra.mxu0 0
        %1304 = vmatprep.subr.bf16.mxu0 0
        %1305 = vmatpush2.bf16.msra.mxu0 0
        %1306 = vmatprep.mubr.bf16.mxu0 0
        %1307 = vmatmul.mubr.bf16.gmra.mxu0 %v1272
        %v1308 = vpop.f32.mrf.mxu0
        %v1309 = vadd.f32 %v1257, %v1308
        %v1310 = vpop.f32.mrf.mxu0
        %v1311 = vpop.f32.mrf.mxu0
        %v1312 = vpop.f32.mrf.mxu0
        %1313 = vdwg.mxu0
        %v1314 = vmul.f32 %v1309, 0.5
        %v1315 = vmul.f32 %v1309, 0.70710677
        %v1316 = verf.f32.pop %v1315
        %v1317 = vadd.f32 %v1316, 1.0
        %v1318 = vmul.f32 %v1314, %v1317
        %v1319 = vpack.c.bf16 %v1318, %v1318
        %v1320 = vld [vmem:[%s12] sm:$0xf]
        %v1321 = vld [vmem:[%s12 + $0x4] sm:$0xf]
        %v1322 = vld [vmem:[%s12 + $0x8] sm:$0xf]
        %v1323 = vld [vmem:[%s12 + $0xc] sm:$0xf]
        %v1324 = vld [vmem:[%s12 + $0x10] sm:$0xf]
        %v1325 = vld [vmem:[%s12 + $0x14] sm:$0xf]
        %v1326 = vld [vmem:[%s12 + $0x18] sm:$0xf]
        %v1327 = vld [vmem:[%s12 + $0x1c] sm:$0xf]
        %v1328 = vld [vmem:[%s12 + $0x20] sm:$0xf]
        %v1329 = vld [vmem:[%s12 + $0x24] sm:$0xf]
        %v1330 = vld [vmem:[%s12 + $0x28] sm:$0xf]
        %v1331 = vld [vmem:[%s12 + $0x2c] sm:$0xf]
        %v1332 = vld [vmem:[%s12 + $0x30] sm:$0xf]
        %v1333 = vld [vmem:[%s12 + $0x34] sm:$0xf]
        %v1334 = vld [vmem:[%s12 + $0x38] sm:$0xf]
        %v1335 = vld [vmem:[%s12 + $0x3c] sm:$0xf]
        %v1336 = vld [vmem:[%s13] sm:$0x1]
        %v1338 = vlaneseq
        %v1339 = vshrl.u32 %v1338, 7
        %v1340 = vsub.s32 0, %v1339
        %v1341 = vrot.slane %v1336, %v1340
        %v1359 = vunpack.c.l.b16 %v1320
        %v1360 = vunpack.c.l.b16 %v1321
        %v1361 = vunpack.c.l.b16 %v1322
        %v1362 = vunpack.c.l.b16 %v1323
        %v1363 = vunpack.c.l.b16 %v1324
        %v1364 = vunpack.c.l.b16 %v1325
        %v1365 = vunpack.c.l.b16 %v1326
        %v1366 = vunpack.c.l.b16 %v1327
        %v1367 = vunpack.c.l.b16 %v1328
        %v1368 = vunpack.c.l.b16 %v1329
        %v1369 = vunpack.c.l.b16 %v1330
        %v1370 = vunpack.c.l.b16 %v1331
        %v1371 = vunpack.c.l.b16 %v1332
        %v1372 = vunpack.c.l.b16 %v1333
        %v1373 = vunpack.c.l.b16 %v1334
        %v1374 = vunpack.c.l.b16 %v1335
        %v1375 = vpack.c.b16 %v1360, %v1359
        %v1376 = vpack.c.b16 %v1362, %v1361
        %v1377 = vpack.c.b16 %v1364, %v1363
        %v1378 = vpack.c.b16 %v1366, %v1365
        %v1379 = vpack.c.b16 %v1368, %v1367
        %v1380 = vpack.c.b16 %v1370, %v1369
        %v1381 = vpack.c.b16 %v1372, %v1371
        %v1382 = vpack.c.b16 %v1374, %v1373
        %1391 = vmatprep.subr.bf16.mxu0 0
        %1392 = vmatpush1.bf16.msra.mxu0 %v1382
        %1393 = vmatprep.subr.bf16.mxu0 0
        %1394 = vmatpush1.bf16.msra.mxu0 %v1381
        %1395 = vmatprep.subr.bf16.mxu0 0
        %1396 = vmatpush1.bf16.msra.mxu0 %v1380
        %1397 = vmatprep.subr.bf16.mxu0 0
        %1398 = vmatpush1.bf16.msra.mxu0 %v1379
        %1399 = vmatprep.subr.bf16.mxu0 0
        %1400 = vmatpush1.bf16.msra.mxu0 %v1378
        %1401 = vmatprep.subr.bf16.mxu0 0
        %1402 = vmatpush1.bf16.msra.mxu0 %v1377
        %1403 = vmatprep.subr.bf16.mxu0 0
        %1404 = vmatpush1.bf16.msra.mxu0 %v1376
        %1405 = vmatprep.subr.bf16.mxu0 0
        %1406 = vmatpush1.bf16.msra.mxu0 %v1375
        %1407 = vmatprep.subr.bf16.mxu0 0
        %1408 = vmatpush2.bf16.msra.mxu0 0
        %1409 = vmatprep.subr.bf16.mxu0 0
        %1410 = vmatpush2.bf16.msra.mxu0 0
        %1411 = vmatprep.subr.bf16.mxu0 0
        %1412 = vmatpush2.bf16.msra.mxu0 0
        %1413 = vmatprep.subr.bf16.mxu0 0
        %1414 = vmatpush2.bf16.msra.mxu0 0
        %1415 = vmatprep.subr.bf16.mxu0 0
        %1416 = vmatpush2.bf16.msra.mxu0 0
        %1417 = vmatprep.subr.bf16.mxu0 0
        %1418 = vmatpush2.bf16.msra.mxu0 0
        %1419 = vmatprep.subr.bf16.mxu0 0
        %1420 = vmatpush2.bf16.msra.mxu0 0
        %1421 = vmatprep.subr.bf16.mxu0 0
        %1422 = vmatpush2.bf16.msra.mxu0 0
        %1423 = vmatprep.mubr.bf16.mxu0 0
        %1424 = vmatmul.mubr.bf16.gmra.mxu0 %v1319
        %v1425 = vpop.f32.mrf.mxu0
        %v1426 = vadd.f32 %v1341, %v1425
        %v1427 = vpop.f32.mrf.mxu0
        %v1428 = vpop.f32.mrf.mxu0
        %v1429 = vpop.f32.mrf.mxu0
        %1430 = vdwg.mxu0
        %v1431 = vadd.f32 %v1216, %v1426
        %1432 = vst.msk [vmem:[%s519] sm:$0xff] %vm1172, %v1431
        %s1433 = sand.u32 %s358, 1
        %s1434 = scalar_lea.sflag [#allocation6], %s1433
        %s1435 = sand.u32 %s358, 1
        %s1436 = smul.addr %s1435, 8
        %s1437 = scalar_lea.vmem [#allocation9], %s1436
        // Predicated region
        $region89: #{tpu_custom_call.1} parent=75 // pred_check
          %p1438 = pneg %p368
        $region90: #{tpu_custom_call.1} parent=75 // pred_check_branch
          %1440 = sbr.rel (%p1438) target = $region92
        $region91: #{tpu_custom_call.1} parent=75 // pred_region
          %s1442 = ssub.s32 128, 128
          %1443 = vsyncadd %s1434, %s1442
          %s1444 = sadd.s32 %s35, %s34
          %s1445 = smul.addr %s1444, 128
          %s1446 = scalar_lea.hbm %s14, %s1445
          %s1448 = sshll.u32 %s1437, 4
          %s1449 = int_to_ptr.vmem [resolvable:$true] %s1448
          %1451 = dma.vmem_to_hbm [thread:$0]  %s1449, 128, %s1446, %s1434
        $region92: #{tpu_custom_call.1} parent=75 // pred_fallthru
          _
      $region76: #{tpu_custom_call.1} parent=5 // pred_fallthru
        _
      %p1452 = scmp.le.s32.totalorder 2, %s25
      // Predicated region
      $region93: #{tpu_custom_call.1} parent=5 // pred_check
        %p1453 = pneg %p1452
      $region94: #{tpu_custom_call.1} parent=5 // pred_check_branch
        %1455 = sbr.rel (%p1453) target = $region96
      $region95: #{tpu_custom_call.1} parent=5 // pred_region
        %s1456 = ssub.s32 %s25, 2
        // Predicated region
        $region97: #{tpu_custom_call.1} parent=95 // pred_check
          %p1457 = pneg %p374
        $region98: #{tpu_custom_call.1} parent=95 // pred_check_branch
          %1459 = sbr.rel (%p1457) target = $region100
        $region99: #{tpu_custom_call.1} parent=95 // pred_region
          %s1460 = sand.u32 %s359, 1
          %s1461 = scalar_lea.sflag [#allocation6], %s1460
          %s1462 = sand.u32 %s359, 1
          %s1463 = smul.addr %s1462, 8
          %s1464 = scalar_lea.vmem [#allocation9], %s1463
          %1465 = dma.done %s1461, 128
        $region100: #{tpu_custom_call.1} parent=95 // pred_fallthru
          _
      $region96: #{tpu_custom_call.1} parent=5 // pred_fallthru
        _
    $region6: #{tpu_custom_call.1} parent=1 // loop_footer
      %s29 = sadd.s32 1, %s25
    $region7: #{tpu_custom_call.1} parent=1 // loop_footer_branch
      %24 = sbr.rel target = $region3
    $region8: #{tpu_custom_call.1} parent=1 // loop_exit
      _
    %1466 = vsyncpa [#allocation5], 1
    %s1467 = scalar_lea.sflag [#allocation5], 1
    %1468 = vsyncpa %s1467, 1
    %1469 = vsyncpa [#allocation8], 1
    %1470 = vsyncpa [#allocation6], 1
    %s1471 = scalar_lea.sflag [#allocation6], 1
    %1472 = vsyncpa %s1471, 1

</llo_original>
